<compile_context>
chip_gen: v7x
topology: tpu7x:2x2x1
jax: 0.10.0
libtpu: 0.0.40
codegen_flags: <defaults>
</compile_context>

<pallas_src>
import math
import jax
import jax.numpy as jnp
from jax.experimental import pallas as pl
from jax.experimental.pallas import tpu as pltpu

# ----- hyperparameters (module defaults shrunk for the demo: B = C = 4) ------
B_CAPS = 4          # input capsule types (module default 32)
K = 3               # conv kernel size
P = 4               # pose matrix is P x P
PSIZE = P * P       # 16
STRIDE = 2
BN_EPS = 1e-5

KKB = K * K * B_CAPS                 # 36   capsules per output position
KKBP = KKB * P                       # 144
POSE_CH = KKB * PSIZE                # 576  (conv1 input channels  = B*K*K*16)
ACT_CH = KKB                         # 36   (conv1 output channels = B*K*K)
OUT_CH = B_CAPS * (PSIZE + 1)        # 68   (conv2 output channels = B*17)
OUT_PAD = 128                        # lane-dense padded head output width
NH = OUT_PAD + ACT_CH                # fused head weight cols: [conv2-pose | conv1]

# Capsule-group tiling of the block-diagonal pose transform.  Only the diagonal
# (GP, GP) block of each group is stored / contracted.  GP=256 fills the v6e/v7x
# 256x256 MXU when KKBP allows it; otherwise 128-wide groups (production B=32
# gives KKBP=1152 -> 9 groups; pairing those into 256-wide matmuls would need
# padding to 10 groups -- left as a follow-up).  At the demo size (KKBP=144)
# there is a single group.
if KKBP % 256 == 0:
    GP = 256
elif KKBP % 128 == 0 and KKBP > 128:
    GP = 128
else:
    GP = KKBP
G = KKBP // GP
GC = GP // P                         # capsules per group


# ------------------------- fused ConvCaps kernel -----------------------------
def _convcaps_kernel(xg_ref, wblk_ref, wh_ref, w2b_ref, bn1_ref, bn2_ref,
                     pose_ref, out_ref):
    """One bb-row tile of: pose transform + conv1/BN/sigmoid + conv2/BN/ReLU.

    xg_ref   : (P, TBB, KKBP)    bf16   xg[p, n, i*P + r] = pose_in[n, i, p, r]
    wblk_ref : (G, GP, GP)       bf16   per-group block-diagonal (W[i] + 1)
    wh_ref   : (P, KKBP, NH)     bf16   fused [conv2-pose(pad 128) | conv1] weights
    w2b_ref  : (ACT_CH, OUT_PAD) bf16   conv2 weights for the activation part
    bn1_ref  : (2, ACT_CH)       f32    BN1 (scale, shift)  -- eval-mode folded
    bn2_ref  : (2, OUT_PAD)      f32    BN2 (scale, shift)
    pose_ref : (P, TBB, KKBP)    bf16   pose_out[p, n, i*P + q] = v[n, i, p, q]
    out_ref  : (TBB, OUT_PAD)    f32    relu(bn2(conv2(concat(pose, act))))
    """
    tbb = out_ref.shape[0]
    acc = jnp.zeros((tbb, NH), jnp.float32)

    for p in range(P):                      # static unroll: P = 4
        if G == 1:
            # per-capsule pose transform: v[n,i,p,:] = x[n,i,p,:] @ (W[i] + 1)
            vp = jnp.dot(xg_ref[p], wblk_ref[0],
                         preferred_element_type=jnp.float32)       # (tbb, KKBP)
            vp_bf = vp.astype(jnp.bfloat16)
            pose_ref[p] = vp_bf                                     # bf16 writeback
        else:
            for g in range(G):              # static unroll: capsule groups
                xpg = xg_ref[p, :, g * GP:(g + 1) * GP]
                vpg = jnp.dot(xpg, wblk_ref[g],
                              preferred_element_type=jnp.float32)   # (tbb, GP)
                pose_ref[p, :, g * GP:(g + 1) * GP] = vpg.astype(jnp.bfloat16)
            vp_bf = pose_ref[p]             # full bf16 slab, read back from VMEM
        # ONE fused head matmul per p (conv2-pose part + conv1 together):
        # the K=KKBP accumulation happens inside the MXU, acc touched P times.
        acc = acc + jnp.dot(vp_bf, wh_ref[p],
                            preferred_element_type=jnp.float32)     # (tbb, NH)

    bn1 = bn1_ref[...]
    bn2 = bn2_ref[...]
    # conv1 -> BN(eval) -> sigmoid     (activation head)
    a = jax.nn.sigmoid(acc[:, OUT_PAD:] * bn1[0:1, :] + bn1[1:2, :])  # (tbb, ACT_CH)
    # conv2 over concat([pose, act]) -> BN(eval) -> ReLU
    o = acc[:, :OUT_PAD] + jnp.dot(a.astype(jnp.bfloat16), w2b_ref[...],
                                   preferred_element_type=jnp.float32)
    o = o * bn2[0:1, :] + bn2[1:2, :]
    out_ref[...] = jnp.maximum(o, 0.0)                               # (tbb, OUT_PAD)


# ----------------------- VMEM-budget-aware tiling -----------------------------
def _vmem_capacity_bytes():
    """Per-generation VMEM capacity (v5e/v6e: 128 MiB, v7x: 64 MiB)."""
    try:
        info = pltpu.get_tpu_info()
        cap = int(getattr(info, "vmem_capacity_bytes", 0))
        if cap > 0:
            return cap
    except Exception:
        pass
    return 64 * 1024 * 1024          # conservative default (v7x per-TC VMEM)


def _plan_tiles(bb):
    """Pick (tbb rows per tile, vmem_limit_bytes) from the VMEM capacity."""
    cap = _vmem_capacity_bytes()
    vmem_limit = (cap * 13) // 16                  # 64 MiB -> 52 MiB, 128 -> 104
    const_bytes = ((G * GP * GP + P * KKBP * NH + ACT_CH * OUT_PAD) * 2
                   + 2 * (ACT_CH + OUT_PAD) * 4)   # single-buffered constants
    # double-buffered per-row pipeline blocks: xg (bf16) + pose (bf16) + out (f32)
    row_bytes = 2 * (P * KKBP * 2 + P * KKBP * 2 + OUT_PAD * 4)
    avail = vmem_limit - const_bytes - (6 << 20)   # compiler scratch / sem slack
    max_rows = max(8, avail // row_bytes)
    # keep at least 2 grid steps so both v7x TensorCores get work
    half_bb = -(-bb // 2)
    tbb = min(2048, int(max_rows), max(8, ((half_bb + 7) // 8) * 8))
    tbb = max(8, (tbb // 8) * 8)
    return int(tbb), int(vmem_limit)


def _const_pipeline_kwargs():
    """Single-buffer the constant-operand inputs (their index_maps are constant).

    Guarded so an older BlockSpec signature just falls back to the default."""
    try:
        pl.BlockSpec((8, 128), lambda i: (0, 0), pipeline_mode=pl.Buffered(1))
        return dict(pipeline_mode=pl.Buffered(1))
    except Exception:
        return {}


_CONST_PIPE = _const_pipeline_kwargs()


def convcaps_fused(xg, wblk, wh, w2b, bn1, bn2, tbb, vmem_limit):
    _, bb_pad, _ = xg.shape
    grid = (bb_pad // tbb,)
    pose, out = pl.pallas_call(
        _convcaps_kernel,
        out_shape=(jax.ShapeDtypeStruct((P, bb_pad, KKBP), jnp.bfloat16),
                   jax.ShapeDtypeStruct((bb_pad, OUT_PAD), jnp.float32)),
        grid=grid,
        in_specs=[
            pl.BlockSpec((P, tbb, KKBP), lambda i: (0, i, 0)),
            pl.BlockSpec((G, GP, GP), lambda i: (0, 0, 0), **_CONST_PIPE),
            pl.BlockSpec((P, KKBP, NH), lambda i: (0, 0, 0), **_CONST_PIPE),
            pl.BlockSpec((ACT_CH, OUT_PAD), lambda i: (0, 0), **_CONST_PIPE),
            pl.BlockSpec((2, ACT_CH), lambda i: (0, 0), **_CONST_PIPE),
            pl.BlockSpec((2, OUT_PAD), lambda i: (0, 0), **_CONST_PIPE),
        ],
        out_specs=[
            pl.BlockSpec((P, tbb, KKBP), lambda i: (0, i, 0)),
            pl.BlockSpec((tbb, OUT_PAD), lambda i: (i, 0)),
        ],
        compiler_params=pltpu.CompilerParams(
            dimension_semantics=("parallel",),       # 2 TCs on v7x split the tiles
            vmem_limit_bytes=vmem_limit),
    )(xg, wblk, wh, w2b, bn1, bn2)
    return pose, out


# ---------------------------- glue (plain JAX) --------------------------------
def conv_caps_forward(x, params):
    """x: (b, h, w, B*(P*P+1)) channels-last, exactly the PyTorch module input."""
    b, h, w, c = x.shape
    assert c == B_CAPS * (PSIZE + 1)

    oh = (h + 2 - K) // STRIDE + 1
    ow = (w + 2 - K) // STRIDE + 1
    bb = b * oh * ow

    # pose slice of the input (like p_in = patch[..., :B*psize] in PyTorch).
    pose_in = x[..., :B_CAPS * PSIZE].astype(jnp.bfloat16)
    # p-major relayout on the COMPACT tensor (cheap), so the expanded patch slab
    # below is emitted directly in the kernel layout and never transposed in XLA.
    xt = pose_in.reshape(b, h, w, B_CAPS, P, P).transpose(4, 0, 1, 2, 3, 5)
    xt = xt.reshape(P, b, h, w, B_CAPS * P)
    xp = jnp.pad(xt, ((0, 0), (0, 0), (1, 1), (1, 1), (0, 0)))   # add_pathes padding
    # K x K stride-2 windows, concatenated along lanes in (ki, kj, capsule, r)
    # order == the kernel's KKBP lane layout; (b, oh, ow)->bb reshape is free.
    cols = []
    for ki in range(K):
        for kj in range(K):
            cols.append(xp[:, :, ki:ki + (oh - 1) * STRIDE + 1:STRIDE,
                               kj:kj + (ow - 1) * STRIDE + 1:STRIDE, :])
    xg = jnp.concatenate(cols, axis=-1).reshape(P, bb, KKBP)
    # TODO(synk): gather the KxK windows inside the kernel (parity-split planes
    # per batch element, or pl.ANY inputs + manual pltpu.make_async_copy) so the
    # 2.25x-expanded slab never hits HBM at all.

    tbb, vmem_limit = _plan_tiles(bb)
    bb_pad = ((bb + tbb - 1) // tbb) * tbb
    if bb_pad != bb:
        xg = jnp.pad(xg, ((0, 0), (0, bb_pad - bb), (0, 0)))

    pose4, out_pad = convcaps_fused(xg, params["wblk"], params["wh"],
                                    params["w2b"], params["bn1"], params["bn2"],
                                    tbb, vmem_limit)

    # head output -> NCHW (like the PyTorch conv2 output); padded rows / padded
    # lanes of out_pad beyond [:bb, :OUT_CH] are dropped here.
    out = out_pad[:bb, :OUT_CH].reshape(b, oh, ow, OUT_CH).transpose(0, 3, 1, 2)
    # p_pose: kernel layout (p, n, i, q) -> PyTorch layout (n, i, p*P + q).
    # Kept in bf16 (inference-grade ~1e-2 tolerance vs the f32 PyTorch reference).
    p_pose = (pose4[:, :bb, :].reshape(P, bb, KKB, P)
              .transpose(1, 2, 0, 3).reshape(bb, KKB, PSIZE))
    return out, p_pose


def init_params(key):
    k1, k2, k3 = jax.random.split(key, 3)
    # self.weights = nn.Parameter(torch.randn(1, K*K*B, P, P)); transform_view uses W+1
    weights = jax.random.normal(k1, (1, KKB, P, P), jnp.float32)
    wp1 = weights[0] + 1.0                                        # (KKB, P, P)
    # only the per-group diagonal blocks of the block-diagonal pose weight
    wp1g = wp1.reshape(G, GC, P, P)
    wblk = jnp.einsum('ac,garq->garcq', jnp.eye(GC, dtype=jnp.float32), wp1g)
    wblk = wblk.reshape(G, GP, GP).astype(jnp.bfloat16)

    # conv1 of BasicConv2d_activation:   Conv2d(POSE_CH, ACT_CH, 1, bias=False)
    wc1 = jax.random.normal(k2, (ACT_CH, POSE_CH), jnp.float32) * 0.05
    # conv1 of BasicConv2d_activationRL: Conv2d(POSE_CH + ACT_CH, OUT_CH, 1, bias=False)
    wc2 = jax.random.normal(k3, (OUT_CH, POSE_CH + ACT_CH), jnp.float32) * 0.05

    # fused head weight: cols [0:OUT_PAD) = conv2 pose part (padded 68 -> 128),
    # cols [OUT_PAD:) = conv1.  Rows reordered from (i, p, q) to (p, i*P + q).
    w2a_t = jnp.pad(wc2[:, :POSE_CH].T, ((0, 0), (0, OUT_PAD - OUT_CH)))   # (576, 128)
    wh = jnp.concatenate([w2a_t, wc1.T], axis=1)                           # (576, NH)
    wh = wh.reshape(KKB, P, P, NH).transpose(1, 0, 2, 3)                   # (p, i, q, NH)
    wh = wh.reshape(P, KKBP, NH).astype(jnp.bfloat16)

    w2b = jnp.pad(wc2[:, POSE_CH:].T, ((0, 0), (0, OUT_PAD - OUT_CH)))     # (36, 128)
    w2b = w2b.astype(jnp.bfloat16)

    # eval-mode BatchNorm folded to per-channel scale/shift
    # (fresh-module stats: mean=0, var=1, gamma=1, beta=0).
    bn_scale = 1.0 / math.sqrt(1.0 + BN_EPS)
    bn1 = jnp.stack([jnp.full((ACT_CH,), bn_scale, jnp.float32),
                     jnp.zeros((ACT_CH,), jnp.float32)])
    bn2 = jnp.stack([jnp.full((OUT_PAD,), bn_scale, jnp.float32),
                     jnp.zeros((OUT_PAD,), jnp.float32)])
    # TODO(synk): EM-routing helpers (m_step/e_step/caps_em_routing/add_coord),
    # beta_u/beta_a and the unused RF / dilated-conv branches are never invoked
    # by forward(), so they are intentionally not implemented here.
    return dict(wblk=wblk, wh=wh, w2b=w2b, bn1=bn1, bn2=bn2)


if __name__ == "__main__":
    key = jax.random.PRNGKey(0)
    kx, kp = jax.random.split(key)
    # input: (b, h, w, B*(P*P+1)) channels-last, as the PyTorch module expects
    x = jax.random.normal(kx, (2, 16, 16, B_CAPS * (PSIZE + 1)), jnp.float32)
    params = init_params(kp)

    fwd = jax.jit(conv_caps_forward)
    out, p_pose = fwd(x, params)
    jax.block_until_ready(out)
    jax.block_until_ready(p_pose)

    assert out.shape == (2, OUT_CH, 8, 8)           # NCHW, oh = ow = (16+2-3)//2 + 1 = 8
    assert p_pose.shape == (2 * 8 * 8, KKB, PSIZE)
    assert bool(jnp.all(jnp.isfinite(out)))
    assert bool(jnp.all(jnp.isfinite(p_pose.astype(jnp.float32))))
    print("KERNEL_OK")
</pallas_src>

<mosaic_0001>
module attributes {stable_mosaic.version = 11 : i64} {
  func.func @_convcaps_kernel(%arg0: i32, %arg1: memref<4x64x144xbf16, #tpu.memory_space<vmem>>, %arg2: memref<1x144x144xbf16, #tpu.memory_space<vmem>>, %arg3: memref<4x144x164xbf16, #tpu.memory_space<vmem>>, %arg4: memref<36x128xbf16, #tpu.memory_space<vmem>>, %arg5: memref<2x36xf32, #tpu.memory_space<vmem>>, %arg6: memref<2x128xf32, #tpu.memory_space<vmem>>, %arg7: memref<4x64x144xbf16, #tpu.memory_space<vmem>>, %arg8: memref<64x128xf32, #tpu.memory_space<vmem>>) attributes {dimension_semantics = [#tpu.dimension_semantics<parallel>], iteration_bounds = array<i64: 2>, scalar_prefetch = 0 : i64, scratch_operands = 0 : i64, tpu.core_type = #tpu.core_type<tc>, window_params = [{transform_indices = @transform_0, window_bounds = array<i64: 4, 64, 144>}, {pipeline_mode = #tpu.pipeline_mode<synchronous>, transform_indices = @transform_1, window_bounds = array<i64: 1, 144, 144>}, {pipeline_mode = #tpu.pipeline_mode<synchronous>, transform_indices = @transform_2, window_bounds = array<i64: 4, 144, 164>}, {pipeline_mode = #tpu.pipeline_mode<synchronous>, transform_indices = @transform_3, window_bounds = array<i64: 36, 128>}, {pipeline_mode = #tpu.pipeline_mode<synchronous>, transform_indices = @transform_4, window_bounds = array<i64: 2, 36>}, {pipeline_mode = #tpu.pipeline_mode<synchronous>, transform_indices = @transform_5, window_bounds = array<i64: 2, 128>}, {transform_indices = @transform_6, window_bounds = array<i64: 4, 64, 144>}, {transform_indices = @transform_7, window_bounds = array<i64: 64, 128>}]} {
    %cst = arith.constant 0.000000e+00 : f32
    %0 = vector.broadcast %cst : f32 to vector<64x164xf32>
    %c0 = arith.constant 0 : index
    %c0_0 = arith.constant 0 : index
    %c0_1 = arith.constant 0 : index
    %1 = vector.load %arg1[%c0, %c0_0, %c0_1] : memref<4x64x144xbf16, #tpu.memory_space<vmem>>, vector<1x64x144xbf16>
    %2 = vector.shape_cast %1 : vector<1x64x144xbf16> to vector<64x144xbf16>
    %c0_2 = arith.constant 0 : index
    %c0_3 = arith.constant 0 : index
    %c0_4 = arith.constant 0 : index
    %3 = vector.load %arg2[%c0_2, %c0_3, %c0_4] : memref<1x144x144xbf16, #tpu.memory_space<vmem>>, vector<1x144x144xbf16>
    %4 = vector.shape_cast %3 : vector<1x144x144xbf16> to vector<144x144xbf16>
    %cst_5 = arith.constant dense<0.000000e+00> : vector<64x144xf32>
    %5 = tpu.matmul %2, %4, %cst_5 {dimension_numbers = #tpu.dot_dimension_numbers<[1], [0], [0], [1], [0, 0, 1, 1], [], []>} : vector<64x144xbf16>, vector<144x144xbf16>, vector<64x144xf32> -> vector<64x144xf32>
    %6 = arith.truncf %5 : vector<64x144xf32> to vector<64x144xbf16>
    %c0_6 = arith.constant 0 : index
    %c0_7 = arith.constant 0 : index
    %c0_8 = arith.constant 0 : index
    %7 = vector.load %arg7[%c0_6, %c0_7, %c0_8] : memref<4x64x144xbf16, #tpu.memory_space<vmem>>, vector<1x64x144xbf16>
    %8 = vector.shape_cast %7 : vector<1x64x144xbf16> to vector<64x144xbf16>
    %9 = vector.shape_cast %6 : vector<64x144xbf16> to vector<1x64x144xbf16>
    tpu.vector_store %arg7[%c0_6, %c0_7, %c0_8], %9 {strides = array<i32>} : memref<4x64x144xbf16, #tpu.memory_space<vmem>>, vector<1x64x144xbf16>,
    %c0_9 = arith.constant 0 : index
    %c0_10 = arith.constant 0 : index
    %c0_11 = arith.constant 0 : index
    %10 = vector.load %arg3[%c0_9, %c0_10, %c0_11] : memref<4x144x164xbf16, #tpu.memory_space<vmem>>, vector<1x144x164xbf16>
    %11 = vector.shape_cast %10 : vector<1x144x164xbf16> to vector<144x164xbf16>
    %cst_12 = arith.constant dense<0.000000e+00> : vector<64x164xf32>
    %12 = tpu.matmul %6, %11, %cst_12 {dimension_numbers = #tpu.dot_dimension_numbers<[1], [0], [0], [1], [0, 0, 1, 1], [], []>} : vector<64x144xbf16>, vector<144x164xbf16>, vector<64x164xf32> -> vector<64x164xf32>
    %13 = arith.addf %0, %12 : vector<64x164xf32>
    %c1 = arith.constant 1 : index
    %c0_13 = arith.constant 0 : index
    %c0_14 = arith.constant 0 : index
    %14 = vector.load %arg1[%c1, %c0_13, %c0_14] : memref<4x64x144xbf16, #tpu.memory_space<vmem>>, vector<1x64x144xbf16>
    %15 = vector.shape_cast %14 : vector<1x64x144xbf16> to vector<64x144xbf16>
    %c0_15 = arith.constant 0 : index
    %c0_16 = arith.constant 0 : index
    %c0_17 = arith.constant 0 : index
    %16 = vector.load %arg2[%c0_15, %c0_16, %c0_17] : memref<1x144x144xbf16, #tpu.memory_space<vmem>>, vector<1x144x144xbf16>
    %17 = vector.shape_cast %16 : vector<1x144x144xbf16> to vector<144x144xbf16>
    %cst_18 = arith.constant dense<0.000000e+00> : vector<64x144xf32>
    %18 = tpu.matmul %15, %17, %cst_18 {dimension_numbers = #tpu.dot_dimension_numbers<[1], [0], [0], [1], [0, 0, 1, 1], [], []>} : vector<64x144xbf16>, vector<144x144xbf16>, vector<64x144xf32> -> vector<64x144xf32>
    %19 = arith.truncf %18 : vector<64x144xf32> to vector<64x144xbf16>
    %c1_19 = arith.constant 1 : index
    %c0_20 = arith.constant 0 : index
    %c0_21 = arith.constant 0 : index
    %20 = vector.load %arg7[%c1_19, %c0_20, %c0_21] : memref<4x64x144xbf16, #tpu.memory_space<vmem>>, vector<1x64x144xbf16>
    %21 = vector.shape_cast %20 : vector<1x64x144xbf16> to vector<64x144xbf16>
    %22 = vector.shape_cast %19 : vector<64x144xbf16> to vector<1x64x144xbf16>
    tpu.vector_store %arg7[%c1_19, %c0_20, %c0_21], %22 {strides = array<i32>} : memref<4x64x144xbf16, #tpu.memory_space<vmem>>, vector<1x64x144xbf16>,
    %c1_22 = arith.constant 1 : index
    %c0_23 = arith.constant 0 : index
    %c0_24 = arith.constant 0 : index
    %23 = vector.load %arg3[%c1_22, %c0_23, %c0_24] : memref<4x144x164xbf16, #tpu.memory_space<vmem>>, vector<1x144x164xbf16>
    %24 = vector.shape_cast %23 : vector<1x144x164xbf16> to vector<144x164xbf16>
    %cst_25 = arith.constant dense<0.000000e+00> : vector<64x164xf32>
    %25 = tpu.matmul %19, %24, %cst_25 {dimension_numbers = #tpu.dot_dimension_numbers<[1], [0], [0], [1], [0, 0, 1, 1], [], []>} : vector<64x144xbf16>, vector<144x164xbf16>, vector<64x164xf32> -> vector<64x164xf32>
    %26 = arith.addf %13, %25 : vector<64x164xf32>
    %c2 = arith.constant 2 : index
    %c0_26 = arith.constant 0 : index
    %c0_27 = arith.constant 0 : index
    %27 = vector.load %arg1[%c2, %c0_26, %c0_27] : memref<4x64x144xbf16, #tpu.memory_space<vmem>>, vector<1x64x144xbf16>
    %28 = vector.shape_cast %27 : vector<1x64x144xbf16> to vector<64x144xbf16>
    %c0_28 = arith.constant 0 : index
    %c0_29 = arith.constant 0 : index
    %c0_30 = arith.constant 0 : index
    %29 = vector.load %arg2[%c0_28, %c0_29, %c0_30] : memref<1x144x144xbf16, #tpu.memory_space<vmem>>, vector<1x144x144xbf16>
    %30 = vector.shape_cast %29 : vector<1x144x144xbf16> to vector<144x144xbf16>
    %cst_31 = arith.constant dense<0.000000e+00> : vector<64x144xf32>
    %31 = tpu.matmul %28, %30, %cst_31 {dimension_numbers = #tpu.dot_dimension_numbers<[1], [0], [0], [1], [0, 0, 1, 1], [], []>} : vector<64x144xbf16>, vector<144x144xbf16>, vector<64x144xf32> -> vector<64x144xf32>
    %32 = arith.truncf %31 : vector<64x144xf32> to vector<64x144xbf16>
    %c2_32 = arith.constant 2 : index
    %c0_33 = arith.constant 0 : index
    %c0_34 = arith.constant 0 : index
    %33 = vector.load %arg7[%c2_32, %c0_33, %c0_34] : memref<4x64x144xbf16, #tpu.memory_space<vmem>>, vector<1x64x144xbf16>
    %34 = vector.shape_cast %33 : vector<1x64x144xbf16> to vector<64x144xbf16>
    %35 = vector.shape_cast %32 : vector<64x144xbf16> to vector<1x64x144xbf16>
    tpu.vector_store %arg7[%c2_32, %c0_33, %c0_34], %35 {strides = array<i32>} : memref<4x64x144xbf16, #tpu.memory_space<vmem>>, vector<1x64x144xbf16>,
    %c2_35 = arith.constant 2 : index
    %c0_36 = arith.constant 0 : index
    %c0_37 = arith.constant 0 : index
    %36 = vector.load %arg3[%c2_35, %c0_36, %c0_37] : memref<4x144x164xbf16, #tpu.memory_space<vmem>>, vector<1x144x164xbf16>
    %37 = vector.shape_cast %36 : vector<1x144x164xbf16> to vector<144x164xbf16>
    %cst_38 = arith.constant dense<0.000000e+00> : vector<64x164xf32>
    %38 = tpu.matmul %32, %37, %cst_38 {dimension_numbers = #tpu.dot_dimension_numbers<[1], [0], [0], [1], [0, 0, 1, 1], [], []>} : vector<64x144xbf16>, vector<144x164xbf16>, vector<64x164xf32> -> vector<64x164xf32>
    %39 = arith.addf %26, %38 : vector<64x164xf32>
    %c3 = arith.constant 3 : index
    %c0_39 = arith.constant 0 : index
    %c0_40 = arith.constant 0 : index
    %40 = vector.load %arg1[%c3, %c0_39, %c0_40] : memref<4x64x144xbf16, #tpu.memory_space<vmem>>, vector<1x64x144xbf16>
    %41 = vector.shape_cast %40 : vector<1x64x144xbf16> to vector<64x144xbf16>
    %c0_41 = arith.constant 0 : index
    %c0_42 = arith.constant 0 : index
    %c0_43 = arith.constant 0 : index
    %42 = vector.load %arg2[%c0_41, %c0_42, %c0_43] : memref<1x144x144xbf16, #tpu.memory_space<vmem>>, vector<1x144x144xbf16>
    %43 = vector.shape_cast %42 : vector<1x144x144xbf16> to vector<144x144xbf16>
    %cst_44 = arith.constant dense<0.000000e+00> : vector<64x144xf32>
    %44 = tpu.matmul %41, %43, %cst_44 {dimension_numbers = #tpu.dot_dimension_numbers<[1], [0], [0], [1], [0, 0, 1, 1], [], []>} : vector<64x144xbf16>, vector<144x144xbf16>, vector<64x144xf32> -> vector<64x144xf32>
    %45 = arith.truncf %44 : vector<64x144xf32> to vector<64x144xbf16>
    %c3_45 = arith.constant 3 : index
    %c0_46 = arith.constant 0 : index
    %c0_47 = arith.constant 0 : index
    %46 = vector.load %arg7[%c3_45, %c0_46, %c0_47] : memref<4x64x144xbf16, #tpu.memory_space<vmem>>, vector<1x64x144xbf16>
    %47 = vector.shape_cast %46 : vector<1x64x144xbf16> to vector<64x144xbf16>
    %48 = vector.shape_cast %45 : vector<64x144xbf16> to vector<1x64x144xbf16>
    tpu.vector_store %arg7[%c3_45, %c0_46, %c0_47], %48 {strides = array<i32>} : memref<4x64x144xbf16, #tpu.memory_space<vmem>>, vector<1x64x144xbf16>,
    %c3_48 = arith.constant 3 : index
    %c0_49 = arith.constant 0 : index
    %c0_50 = arith.constant 0 : index
    %49 = vector.load %arg3[%c3_48, %c0_49, %c0_50] : memref<4x144x164xbf16, #tpu.memory_space<vmem>>, vector<1x144x164xbf16>
    %50 = vector.shape_cast %49 : vector<1x144x164xbf16> to vector<144x164xbf16>
    %cst_51 = arith.constant dense<0.000000e+00> : vector<64x164xf32>
    %51 = tpu.matmul %45, %50, %cst_51 {dimension_numbers = #tpu.dot_dimension_numbers<[1], [0], [0], [1], [0, 0, 1, 1], [], []>} : vector<64x144xbf16>, vector<144x164xbf16>, vector<64x164xf32> -> vector<64x164xf32>
    %52 = arith.addf %39, %51 : vector<64x164xf32>
    %c0_52 = arith.constant 0 : index
    %c0_53 = arith.constant 0 : index
    %53 = vector.load %arg5[%c0_52, %c0_53] : memref<2x36xf32, #tpu.memory_space<vmem>>, vector<2x36xf32>
    %c0_54 = arith.constant 0 : index
    %c0_55 = arith.constant 0 : index
    %54 = vector.load %arg6[%c0_54, %c0_55] : memref<2x128xf32, #tpu.memory_space<vmem>>, vector<2x128xf32>
    %55 = vector.extract_strided_slice %52 {offsets = [0, 128], sizes = [64, 36], strides = [1, 1]} : vector<64x164xf32> to vector<64x36xf32>
    %56 = vector.extract_strided_slice %53 {offsets = [0, 0], sizes = [1, 36], strides = [1, 1]} : vector<2x36xf32> to vector<1x36xf32>
    %57 = vector.broadcast %56 : vector<1x36xf32> to vector<64x36xf32>
    %58 = arith.mulf %55, %57 : vector<64x36xf32>
    %59 = vector.extract_strided_slice %53 {offsets = [1, 0], sizes = [1, 36], strides = [1, 1]} : vector<2x36xf32> to vector<1x36xf32>
    %60 = vector.broadcast %59 : vector<1x36xf32> to vector<64x36xf32>
    %61 = arith.addf %58, %60 : vector<64x36xf32>
    %62 = arith.negf %61 : vector<64x36xf32>
    %63 = math.exp %62 : vector<64x36xf32>
    %cst_56 = arith.constant 1.000000e+00 : f32
    %64 = vector.broadcast %cst_56 : f32 to vector<64x36xf32>
    %65 = arith.addf %64, %63 : vector<64x36xf32>
    %66 = arith.divf %64, %65 : vector<64x36xf32>
    %67 = vector.extract_strided_slice %52 {offsets = [0, 0], sizes = [64, 128], strides = [1, 1]} : vector<64x164xf32> to vector<64x128xf32>
    %68 = arith.truncf %66 : vector<64x36xf32> to vector<64x36xbf16>
    %c0_57 = arith.constant 0 : index
    %c0_58 = arith.constant 0 : index
    %69 = vector.load %arg4[%c0_57, %c0_58] : memref<36x128xbf16, #tpu.memory_space<vmem>>, vector<36x128xbf16>
    %cst_59 = arith.constant dense<0.000000e+00> : vector<64x128xf32>
    %70 = tpu.matmul %68, %69, %cst_59 {dimension_numbers = #tpu.dot_dimension_numbers<[1], [0], [0], [1], [0, 0, 1, 1], [], []>} : vector<64x36xbf16>, vector<36x128xbf16>, vector<64x128xf32> -> vector<64x128xf32>
    %71 = arith.addf %67, %70 : vector<64x128xf32>
    %72 = vector.extract_strided_slice %54 {offsets = [0, 0], sizes = [1, 128], strides = [1, 1]} : vector<2x128xf32> to vector<1x128xf32>
    %73 = vector.broadcast %72 : vector<1x128xf32> to vector<64x128xf32>
    %74 = arith.mulf %71, %73 : vector<64x128xf32>
    %75 = vector.extract_strided_slice %54 {offsets = [1, 0], sizes = [1, 128], strides = [1, 1]} : vector<2x128xf32> to vector<1x128xf32>
    %76 = vector.broadcast %75 : vector<1x128xf32> to vector<64x128xf32>
    %77 = arith.addf %74, %76 : vector<64x128xf32>
    %cst_60 = arith.constant 0.000000e+00 : f32
    %78 = vector.broadcast %cst_60 : f32 to vector<64x128xf32>
    %79 = arith.maximumf %77, %78 : vector<64x128xf32>
    %c0_61 = arith.constant 0 : index
    %c0_62 = arith.constant 0 : index
    %80 = vector.load %arg8[%c0_61, %c0_62] : memref<64x128xf32, #tpu.memory_space<vmem>>, vector<64x128xf32>
    tpu.vector_store %arg8[%c0_61, %c0_62], %79 {strides = array<i32>} : memref<64x128xf32, #tpu.memory_space<vmem>>, vector<64x128xf32>,
    return
  }
  func.func @transform_0(%arg0: i32) -> (i32, i32, i32) {
    %c0_i32 = arith.constant 0 : i32
    %c0_i32_0 = arith.constant 0 : i32
    %c0_i32_1 = arith.constant 0 : i32
    return %c0_i32, %arg0, %c0_i32_0 : i32, i32, i32
  }
  func.func @transform_1(%arg0: i32) -> (i32, i32, i32) {
    %c0_i32 = arith.constant 0 : i32
    %c0_i32_0 = arith.constant 0 : i32
    %c0_i32_1 = arith.constant 0 : i32
    %c0_i32_2 = arith.constant 0 : i32
    return %c0_i32, %c0_i32_0, %c0_i32_1 : i32, i32, i32
  }
  func.func @transform_2(%arg0: i32) -> (i32, i32, i32) {
    %c0_i32 = arith.constant 0 : i32
    %c0_i32_0 = arith.constant 0 : i32
    %c0_i32_1 = arith.constant 0 : i32
    %c0_i32_2 = arith.constant 0 : i32
    return %c0_i32, %c0_i32_0, %c0_i32_1 : i32, i32, i32
  }
  func.func @transform_3(%arg0: i32) -> (i32, i32) {
    %c0_i32 = arith.constant 0 : i32
    %c0_i32_0 = arith.constant 0 : i32
    %c0_i32_1 = arith.constant 0 : i32
    return %c0_i32, %c0_i32_0 : i32, i32
  }
  func.func @transform_4(%arg0: i32) -> (i32, i32) {
    %c0_i32 = arith.constant 0 : i32
    %c0_i32_0 = arith.constant 0 : i32
    %c0_i32_1 = arith.constant 0 : i32
    return %c0_i32, %c0_i32_0 : i32, i32
  }
  func.func @transform_5(%arg0: i32) -> (i32, i32) {
    %c0_i32 = arith.constant 0 : i32
    %c0_i32_0 = arith.constant 0 : i32
    %c0_i32_1 = arith.constant 0 : i32
    return %c0_i32, %c0_i32_0 : i32, i32
  }
  func.func @transform_6(%arg0: i32) -> (i32, i32, i32) {
    %c0_i32 = arith.constant 0 : i32
    %c0_i32_0 = arith.constant 0 : i32
    %c0_i32_1 = arith.constant 0 : i32
    return %c0_i32, %arg0, %c0_i32_0 : i32, i32, i32
  }
  func.func @transform_7(%arg0: i32) -> (i32, i32) {
    %c0_i32 = arith.constant 0 : i32
    %c0_i32_0 = arith.constant 0 : i32
    return %arg0, %c0_i32 : i32, i32
  }
}

</mosaic_0001>

<llo_original>
// kernel: conv_caps_forward.1
$region0: #{conv_caps_forward.1}
  #allocation0 [shape = 'u32[]', space=smem, size = 0x4, offset = 0x4, fixed_abs, tag = 'smem constant byte address 0x4 - core index']
  #allocation1 [shape = 'u32[144,128]{1,0:T(1,128)}', space=vmem, size = 0x12000, scoped, tag = 'internal scratch']
  %s0 = inlined_call_operand.vmem [shape: bf16[4,128,144], index: 0, kind: input, shape index: {}]
  %s1 = inlined_call_operand.vmem [shape: bf16[1,144,144], index: 1, kind: input, shape index: {}]
  %s2 = inlined_call_operand.vmem [shape: bf16[4,144,164], index: 2, kind: input, shape index: {}]
  %s3 = inlined_call_operand.vmem [shape: bf16[36,128], index: 3, kind: input, shape index: {}]
  %s4 = inlined_call_operand.vmem [shape: f32[2,36], index: 4, kind: input, shape index: {}]
  %s5 = inlined_call_operand.vmem [shape: f32[2,128], index: 5, kind: input, shape index: {}]
  %s6 = inlined_call_operand.vmem [shape: bf16[4,128,144], index: 6, kind: output, shape index: {0}]
  %s7 = inlined_call_operand.hbm [shape: f32[128,128], index: 7, kind: output, shape index: {1}]
  %8 = xla_tuple %s6, %s7
  %s9 = sld [smem:[#allocation0]]
  $region137: #{conv_caps_forward.1} parent=0
    _
  %s11 = ssub.s32 1, %s9
  %s12 = scalar_select 0, %s11, %s9
  $region1: #{conv_caps_forward.1} parent=0
    #allocation2 [shape = 'u8[262144]{0}', space=vmem, size = 0x40000, scoped, tag = 'input window, operand 0']
    #allocation3 [shape = 'u8[262144]{0}', space=vmem, size = 0x40000, scoped, tag = 'output window, operand 0']
    #allocation4 [shape = 'u8[65536]{0}', space=vmem, size = 0x10000, scoped, tag = 'output window, operand 1']
    #allocation5 [shape = 's32[2]{0}', space=sflag, size = 0x8, scoped, tag = 'scoped memory for conv_caps_forward.1']
    %13 = vsyncpa [#allocation5], 0
    %s14 = scalar_lea.sflag [#allocation5], 1
    %15 = vsyncpa %s14, 0
    loop: start=0, step=1, limit=4
    $region2: #{conv_caps_forward.1} parent=1 // loop_pre_header
      _
    $region3: #{conv_caps_forward.1} parent=1 // loop_header
      %s17 = sphi 0, %s21
      %p18 = scmp.ge.s32.totalorder %s17, 4
      %s27 = sphi 0, %s29
      %s30 = sphi 0, %s27
      %s31 = sphi 0, %s30
      %s47 = sphi 0, %s31
      %s51 = sphi 0, %s51
      %s53 = sphi 0, %s51
      %s54 = sphi 0, %s53
      %s68 = sphi 0, %s54
      %s72 = sphi 0, %s72
      %s74 = sphi 0, %s72
      %s75 = sphi 0, %s74
      %s89 = sphi 0, %s75
      %s93 = sphi 0, %s93
      %s95 = sphi 0, %s93
      %s96 = sphi 0, %s95
      %s110 = sphi 0, %s96
      %s114 = sphi 0, %s114
      %s116 = sphi 0, %s114
      %s117 = sphi 0, %s116
      %s131 = sphi 0, %s117
      %s135 = sphi 0, %s135
      %s137 = sphi 0, %s135
      %s138 = sphi 0, %s137
      %s152 = sphi 0, %s138
      %s158 = sphi 0, %s160
      %s161 = sphi 0, %s158
      %s162 = sphi 0, %s161
      %s178 = sphi 0, %s162
      %s184 = sphi 0, %s186
      %s187 = sphi 0, %s184
      %s188 = sphi 0, %s187
      %s204 = sphi 0, %s188
    $region4: #{conv_caps_forward.1} parent=1 // loop_header_branch
      %20 = sbr.rel (%p18) target = $region8
    $region5: #{conv_caps_forward.1} parent=1 // loop_body
      %s22 = ssub.s32 %s17, 1
      %s23 = ssub.s32 %s17, 2
      %s24 = sadd.s32 %s17, 1
      %s25 = ssub.s32 %s17, %s24
      %p26 = scmp.eq.s32.totalorder %s25, 0
      %s28 = sadd.s32 %s27, 1
      %s29 = scalar_select %p26, %s27, %s28
      %p32 = pneg %p26
      %p33 = scmp.eq.s32.totalorder %s17, 1
      %p34 = por %p32, %p33
      %p35 = scmp.ne.s32.totalorder %s27, %s30
      %p36 = scmp.eq.s32.totalorder %s17, 0
      %p37 = por %p35, %p36
      %p38 = scmp.ne.s32.totalorder %s27, %s30
      %p39 = scmp.eq.s32.totalorder %s22, 1
      %p40 = por %p38, %p39
      %p41 = scmp.ne.s32.totalorder %s30, %s31
      %p42 = scmp.eq.s32.totalorder %s22, 0
      %p43 = por %p41, %p42
      %p44 = scmp.ne.s32.totalorder %s30, %s31
      %p45 = scmp.eq.s32.totalorder %s23, 1
      %p46 = por %p44, %p45
      %p48 = scmp.ne.s32.totalorder %s31, %s47
      %p49 = scmp.eq.s32.totalorder %s23, 0
      %p50 = por %p48, %p49
      %s52 = sadd.s32 %s51, 1
      %p55 = scmp.eq.s32.totalorder %s17, 1
      %p56 = scmp.ne.s32.totalorder %s51, %s53
      %p57 = scmp.eq.s32.totalorder %s17, 0
      %p58 = por %p56, %p57
      %p59 = scmp.ne.s32.totalorder %s51, %s53
      %p60 = scmp.eq.s32.totalorder %s22, 1
      %p61 = por %p59, %p60
      %p62 = scmp.ne.s32.totalorder %s53, %s54
      %p63 = scmp.eq.s32.totalorder %s22, 0
      %p64 = por %p62, %p63
      %p65 = scmp.ne.s32.totalorder %s53, %s54
      %p66 = scmp.eq.s32.totalorder %s23, 1
      %p67 = por %p65, %p66
      %p69 = scmp.ne.s32.totalorder %s54, %s68
      %p70 = scmp.eq.s32.totalorder %s23, 0
      %p71 = por %p69, %p70
      %s73 = sadd.s32 %s72, 1
      %p76 = scmp.eq.s32.totalorder %s17, 1
      %p77 = scmp.ne.s32.totalorder %s72, %s74
      %p78 = scmp.eq.s32.totalorder %s17, 0
      %p79 = por %p77, %p78
      %p80 = scmp.ne.s32.totalorder %s72, %s74
      %p81 = scmp.eq.s32.totalorder %s22, 1
      %p82 = por %p80, %p81
      %p83 = scmp.ne.s32.totalorder %s74, %s75
      %p84 = scmp.eq.s32.totalorder %s22, 0
      %p85 = por %p83, %p84
      %p86 = scmp.ne.s32.totalorder %s74, %s75
      %p87 = scmp.eq.s32.totalorder %s23, 1
      %p88 = por %p86, %p87
      %p90 = scmp.ne.s32.totalorder %s75, %s89
      %p91 = scmp.eq.s32.totalorder %s23, 0
      %p92 = por %p90, %p91
      %s94 = sadd.s32 %s93, 1
      %p97 = scmp.eq.s32.totalorder %s17, 1
      %p98 = scmp.ne.s32.totalorder %s93, %s95
      %p99 = scmp.eq.s32.totalorder %s17, 0
      %p100 = por %p98, %p99
      %p101 = scmp.ne.s32.totalorder %s93, %s95
      %p102 = scmp.eq.s32.totalorder %s22, 1
      %p103 = por %p101, %p102
      %p104 = scmp.ne.s32.totalorder %s95, %s96
      %p105 = scmp.eq.s32.totalorder %s22, 0
      %p106 = por %p104, %p105
      %p107 = scmp.ne.s32.totalorder %s95, %s96
      %p108 = scmp.eq.s32.totalorder %s23, 1
      %p109 = por %p107, %p108
      %p111 = scmp.ne.s32.totalorder %s96, %s110
      %p112 = scmp.eq.s32.totalorder %s23, 0
      %p113 = por %p111, %p112
      %s115 = sadd.s32 %s114, 1
      %p118 = scmp.eq.s32.totalorder %s17, 1
      %p119 = scmp.ne.s32.totalorder %s114, %s116
      %p120 = scmp.eq.s32.totalorder %s17, 0
      %p121 = por %p119, %p120
      %p122 = scmp.ne.s32.totalorder %s114, %s116
      %p123 = scmp.eq.s32.totalorder %s22, 1
      %p124 = por %p122, %p123
      %p125 = scmp.ne.s32.totalorder %s116, %s117
      %p126 = scmp.eq.s32.totalorder %s22, 0
      %p127 = por %p125, %p126
      %p128 = scmp.ne.s32.totalorder %s116, %s117
      %p129 = scmp.eq.s32.totalorder %s23, 1
      %p130 = por %p128, %p129
      %p132 = scmp.ne.s32.totalorder %s117, %s131
      %p133 = scmp.eq.s32.totalorder %s23, 0
      %p134 = por %p132, %p133
      %s136 = sadd.s32 %s135, 1
      %p139 = scmp.eq.s32.totalorder %s17, 1
      %p140 = scmp.ne.s32.totalorder %s135, %s137
      %p141 = scmp.eq.s32.totalorder %s17, 0
      %p142 = por %p140, %p141
      %p143 = scmp.ne.s32.totalorder %s135, %s137
      %p144 = scmp.eq.s32.totalorder %s22, 1
      %p145 = por %p143, %p144
      %p146 = scmp.ne.s32.totalorder %s137, %s138
      %p147 = scmp.eq.s32.totalorder %s22, 0
      %p148 = por %p146, %p147
      %p149 = scmp.ne.s32.totalorder %s137, %s138
      %p150 = scmp.eq.s32.totalorder %s23, 1
      %p151 = por %p149, %p150
      %p153 = scmp.ne.s32.totalorder %s138, %s152
      %p154 = scmp.eq.s32.totalorder %s23, 0
      %p155 = por %p153, %p154
      %s156 = ssub.s32 %s17, %s24
      %p157 = scmp.eq.s32.totalorder %s156, 0
      %s159 = sadd.s32 %s158, 1
      %s160 = scalar_select %p157, %s158, %s159
      %p163 = pneg %p157
      %p164 = scmp.eq.s32.totalorder %s17, 1
      %p165 = por %p163, %p164
      %p166 = scmp.ne.s32.totalorder %s158, %s161
      %p167 = scmp.eq.s32.totalorder %s17, 0
      %p168 = por %p166, %p167
      %p169 = scmp.ne.s32.totalorder %s158, %s161
      %p170 = scmp.eq.s32.totalorder %s22, 1
      %p171 = por %p169, %p170
      %p172 = scmp.ne.s32.totalorder %s161, %s162
      %p173 = scmp.eq.s32.totalorder %s22, 0
      %p174 = por %p172, %p173
      %p175 = scmp.ne.s32.totalorder %s161, %s162
      %p176 = scmp.eq.s32.totalorder %s23, 1
      %p177 = por %p175, %p176
      %p179 = scmp.ne.s32.totalorder %s162, %s178
      %p180 = scmp.eq.s32.totalorder %s23, 0
      %p181 = por %p179, %p180
      %s182 = ssub.s32 %s17, %s24
      %p183 = scmp.eq.s32.totalorder %s182, 0
      %s185 = sadd.s32 %s184, 1
      %s186 = scalar_select %p183, %s184, %s185
      %p189 = pneg %p183
      %p190 = scmp.eq.s32.totalorder %s17, 1
      %p191 = por %p189, %p190
      %p192 = scmp.ne.s32.totalorder %s184, %s187
      %p193 = scmp.eq.s32.totalorder %s17, 0
      %p194 = por %p192, %p193
      %p195 = scmp.ne.s32.totalorder %s184, %s187
      %p196 = scmp.eq.s32.totalorder %s22, 1
      %p197 = por %p195, %p196
      %p198 = scmp.ne.s32.totalorder %s187, %s188
      %p199 = scmp.eq.s32.totalorder %s22, 0
      %p200 = por %p198, %p199
      %p201 = scmp.ne.s32.totalorder %s187, %s188
      %p202 = scmp.eq.s32.totalorder %s23, 1
      %p203 = por %p201, %p202
      %p205 = scmp.ne.s32.totalorder %s188, %s204
      %p206 = scmp.eq.s32.totalorder %s23, 0
      %p207 = por %p205, %p206
      %p208 = scmp.le.s32.totalorder 1, %s17
      %p209 = scmp.lt.s32.totalorder %s17, 3
      %p210 = pnand %p208, %p209
      %p211 = pneg %p210
      // Predicated region
      $region9: #{conv_caps_forward.1} parent=5 // pred_check
        _
      $region10: #{conv_caps_forward.1} parent=5 // pred_check_branch
        %213 = sbr.rel (%p210) target = $region12
      $region11: #{conv_caps_forward.1} parent=5 // pred_region
        %s214 = ssub.s32 %s17, 1
        // Predicated region
        $region13: #{conv_caps_forward.1} parent=11 // pred_check
          %p215 = pneg %p64
        $region14: #{conv_caps_forward.1} parent=11 // pred_check_branch
          %217 = sbr.rel (%p215) target = $region16
        $region15: #{conv_caps_forward.1} parent=11 // pred_region
          _
        $region16: #{conv_caps_forward.1} parent=11 // pred_fallthru
          _
        // Predicated region
        $region17: #{conv_caps_forward.1} parent=11 // pred_check
          %p218 = pneg %p85
        $region18: #{conv_caps_forward.1} parent=11 // pred_check_branch
          %220 = sbr.rel (%p218) target = $region20
        $region19: #{conv_caps_forward.1} parent=11 // pred_region
          _
        $region20: #{conv_caps_forward.1} parent=11 // pred_fallthru
          _
        // Predicated region
        $region21: #{conv_caps_forward.1} parent=11 // pred_check
          %p221 = pneg %p106
        $region22: #{conv_caps_forward.1} parent=11 // pred_check_branch
          %223 = sbr.rel (%p221) target = $region24
        $region23: #{conv_caps_forward.1} parent=11 // pred_region
          _
        $region24: #{conv_caps_forward.1} parent=11 // pred_fallthru
          _
        // Predicated region
        $region25: #{conv_caps_forward.1} parent=11 // pred_check
          %p224 = pneg %p127
        $region26: #{conv_caps_forward.1} parent=11 // pred_check_branch
          %226 = sbr.rel (%p224) target = $region28
        $region27: #{conv_caps_forward.1} parent=11 // pred_region
          _
        $region28: #{conv_caps_forward.1} parent=11 // pred_fallthru
          _
        // Predicated region
        $region29: #{conv_caps_forward.1} parent=11 // pred_check
          %p227 = pneg %p148
        $region30: #{conv_caps_forward.1} parent=11 // pred_check_branch
          %229 = sbr.rel (%p227) target = $region32
        $region31: #{conv_caps_forward.1} parent=11 // pred_region
          _
        $region32: #{conv_caps_forward.1} parent=11 // pred_fallthru
          _
      $region12: #{conv_caps_forward.1} parent=5 // pred_fallthru
        _
      %p230 = scmp.lt.s32.totalorder %s17, 2
      // Predicated region
      $region33: #{conv_caps_forward.1} parent=5 // pred_check
        %p231 = pneg %p230
      $region34: #{conv_caps_forward.1} parent=5 // pred_check_branch
        %233 = sbr.rel (%p231) target = $region36
      $region35: #{conv_caps_forward.1} parent=5 // pred_region
        // Predicated region
        $region37: #{conv_caps_forward.1} parent=35 // pred_check
          %p234 = pneg %p37
        $region38: #{conv_caps_forward.1} parent=35 // pred_check_branch
          %236 = sbr.rel (%p234) target = $region40
        $region39: #{conv_caps_forward.1} parent=35 // pred_region
          %s237 = sand.u32 %s27, 1
          %s238 = sand.u32 %s27, 1
          %s239 = smul.addr %s238, 256
          %s240 = scalar_lea.vmem [#allocation2], %s239
          %s241 = smul.u32 8, %s17
          %s242 = smul.addr %s241, 2
          %s243 = smul.addr %s242, 4
          %s244 = scalar_lea.vmem %s0, %s243
          // Predicated region
          $region41: #{conv_caps_forward.1} parent=39 // pred_check
            _
          $region42: #{conv_caps_forward.1} parent=39 // pred_check_branch
            %246 = sbr.rel (0) target = $region44
          $region43: #{conv_caps_forward.1} parent=39 // pred_region
            // Predicated region
            $region45: #{conv_caps_forward.1} parent=43 // pred_check
              _
            $region46: #{conv_caps_forward.1} parent=43 // pred_check_branch
              %248 = sbr.rel (0) target = $region48
            $region47: #{conv_caps_forward.1} parent=43 // pred_region
              // Predicated region
              $region60: #{conv_caps_forward.1} parent=47 // pred_check
                _
              $region61: #{conv_caps_forward.1} parent=47 // pred_check_branch
                %325 = sbr.rel (0) target = $region63
              $region62: #{conv_caps_forward.1} parent=47 // pred_region
                loop: start=0, step=1, limit=1
                $region64: #{conv_caps_forward.1} parent=62 // loop_pre_header
                  _
                $region65: #{conv_caps_forward.1} parent=62 // loop_header
                  %s327 = sphi 0, %s331
                  %p328 = scmp.ge.s32.totalorder %s327, 1
                  %s332 = sphi %s244, %s244
                  %s333 = sphi %s240, %s240
                $region66: #{conv_caps_forward.1} parent=62 // loop_header_branch
                  %330 = sbr.rel (%p328) target = $region70
                $region67: #{conv_caps_forward.1} parent=62 // loop_body
                  %v334 = vld [vmem:[%s332] sm:$0xff]
                  %335 = vst [vmem:[%s333] sm:$0xff] %v334
                  %v336 = vld [vmem:[%s332 + $0x8] sm:$0xff]
                  %337 = vst [vmem:[%s333 + $0x8] sm:$0xff] %v336
                  %v338 = vld [vmem:[%s332 + $0x10] sm:$0xff]
                  %339 = vst [vmem:[%s333 + $0x10] sm:$0xff] %v338
                  %v340 = vld [vmem:[%s332 + $0x18] sm:$0xff]
                  %341 = vst [vmem:[%s333 + $0x18] sm:$0xff] %v340
                  %v342 = vld [vmem:[%s332 + $0x20] sm:$0xff]
                  %343 = vst [vmem:[%s333 + $0x20] sm:$0xff] %v342
                  %v344 = vld [vmem:[%s332 + $0x28] sm:$0xff]
                  %345 = vst [vmem:[%s333 + $0x28] sm:$0xff] %v344
                  %v346 = vld [vmem:[%s332 + $0x30] sm:$0xff]
                  %347 = vst [vmem:[%s333 + $0x30] sm:$0xff] %v346
                  %v348 = vld [vmem:[%s332 + $0x38] sm:$0xff]
                  %349 = vst [vmem:[%s333 + $0x38] sm:$0xff] %v348
                  %v350 = vld [vmem:[%s332 + $0x80] sm:$0xff]
                  %351 = vst [vmem:[%s333 + $0x40] sm:$0xff] %v350
                  %v352 = vld [vmem:[%s332 + $0x88] sm:$0xff]
                  %353 = vst [vmem:[%s333 + $0x48] sm:$0xff] %v352
                  %v354 = vld [vmem:[%s332 + $0x90] sm:$0xff]
                  %355 = vst [vmem:[%s333 + $0x50] sm:$0xff] %v354
                  %v356 = vld [vmem:[%s332 + $0x98] sm:$0xff]
                  %357 = vst [vmem:[%s333 + $0x58] sm:$0xff] %v356
                  %v358 = vld [vmem:[%s332 + $0xa0] sm:$0xff]
                  %359 = vst [vmem:[%s333 + $0x60] sm:$0xff] %v358
                  %v360 = vld [vmem:[%s332 + $0xa8] sm:$0xff]
                  %361 = vst [vmem:[%s333 + $0x68] sm:$0xff] %v360
                  %v362 = vld [vmem:[%s332 + $0xb0] sm:$0xff]
                  %363 = vst [vmem:[%s333 + $0x70] sm:$0xff] %v362
                  %v364 = vld [vmem:[%s332 + $0xb8] sm:$0xff]
                  %365 = vst [vmem:[%s333 + $0x78] sm:$0xff] %v364
                  %v366 = vld [vmem:[%s332 + $0x100] sm:$0xff]
                  %367 = vst [vmem:[%s333 + $0x80] sm:$0xff] %v366
                  %v368 = vld [vmem:[%s332 + $0x108] sm:$0xff]
                  %369 = vst [vmem:[%s333 + $0x88] sm:$0xff] %v368
                  %v370 = vld [vmem:[%s332 + $0x110] sm:$0xff]
                  %371 = vst [vmem:[%s333 + $0x90] sm:$0xff] %v370
                  %v372 = vld [vmem:[%s332 + $0x118] sm:$0xff]
                  %373 = vst [vmem:[%s333 + $0x98] sm:$0xff] %v372
                  %v374 = vld [vmem:[%s332 + $0x120] sm:$0xff]
                  %375 = vst [vmem:[%s333 + $0xa0] sm:$0xff] %v374
                  %v376 = vld [vmem:[%s332 + $0x128] sm:$0xff]
                  %377 = vst [vmem:[%s333 + $0xa8] sm:$0xff] %v376
                  %v378 = vld [vmem:[%s332 + $0x130] sm:$0xff]
                  %379 = vst [vmem:[%s333 + $0xb0] sm:$0xff] %v378
                  %v380 = vld [vmem:[%s332 + $0x138] sm:$0xff]
                  %381 = vst [vmem:[%s333 + $0xb8] sm:$0xff] %v380
                  %v382 = vld [vmem:[%s332 + $0x180] sm:$0xff]
                  %383 = vst [vmem:[%s333 + $0xc0] sm:$0xff] %v382
                  %v384 = vld [vmem:[%s332 + $0x188] sm:$0xff]
                  %385 = vst [vmem:[%s333 + $0xc8] sm:$0xff] %v384
                  %v386 = vld [vmem:[%s332 + $0x190] sm:$0xff]
                  %387 = vst [vmem:[%s333 + $0xd0] sm:$0xff] %v386
                  %v388 = vld [vmem:[%s332 + $0x198] sm:$0xff]
                  %389 = vst [vmem:[%s333 + $0xd8] sm:$0xff] %v388
                  %v390 = vld [vmem:[%s332 + $0x1a0] sm:$0xff]
                  %391 = vst [vmem:[%s333 + $0xe0] sm:$0xff] %v390
                  %v392 = vld [vmem:[%s332 + $0x1a8] sm:$0xff]
                  %393 = vst [vmem:[%s333 + $0xe8] sm:$0xff] %v392
                  %v394 = vld [vmem:[%s332 + $0x1b0] sm:$0xff]
                  %395 = vst [vmem:[%s333 + $0xf0] sm:$0xff] %v394
                  %v396 = vld [vmem:[%s332 + $0x1b8] sm:$0xff]
                  %397 = vst [vmem:[%s333 + $0xf8] sm:$0xff] %v396
                $region68: #{conv_caps_forward.1} parent=62 // loop_footer
                  %s331 = sadd.s32 1, %s327
                $region69: #{conv_caps_forward.1} parent=62 // loop_footer_branch
                  %326 = sbr.rel target = $region65
                $region70: #{conv_caps_forward.1} parent=62 // loop_exit
                  _
              $region63: #{conv_caps_forward.1} parent=47 // pred_fallthru
                _
              // Predicated region
              $region71: #{conv_caps_forward.1} parent=47 // pred_check
                _
              $region72: #{conv_caps_forward.1} parent=47 // pred_check_branch
                %399 = sbr.rel target = $region74
              $region73: #{conv_caps_forward.1} parent=47 // pred_region
                _
              $region74: #{conv_caps_forward.1} parent=47 // pred_fallthru
                _
            $region48: #{conv_caps_forward.1} parent=43 // pred_fallthru
              _
            // Predicated region
            $region49: #{conv_caps_forward.1} parent=43 // pred_check
              _
            $region50: #{conv_caps_forward.1} parent=43 // pred_check_branch
              %250 = sbr.rel target = $region52
            $region51: #{conv_caps_forward.1} parent=43 // pred_region
              loop: start=0, step=1, limit=1
              $region53: #{conv_caps_forward.1} parent=51 // loop_pre_header
                _
              $region54: #{conv_caps_forward.1} parent=51 // loop_header
                %s253 = sphi 0, %s257
                %p254 = scmp.ge.s32.totalorder %s253, 1
                %s258 = sphi %s244, %s244
                %s259 = sphi %s240, %s240
              $region55: #{conv_caps_forward.1} parent=51 // loop_header_branch
                %256 = sbr.rel (%p254) target = $region59
              $region56: #{conv_caps_forward.1} parent=51 // loop_body
                %v260 = vld [vmem:[%s258] sm:$0xff]
                %261 = vst [vmem:[%s259] sm:$0xff] %v260
                %v262 = vld [vmem:[%s258 + $0x8] sm:$0xff]
                %263 = vst [vmem:[%s259 + $0x8] sm:$0xff] %v262
                %v264 = vld [vmem:[%s258 + $0x10] sm:$0xff]
                %265 = vst [vmem:[%s259 + $0x10] sm:$0xff] %v264
                %v266 = vld [vmem:[%s258 + $0x18] sm:$0xff]
                %267 = vst [vmem:[%s259 + $0x18] sm:$0xff] %v266
                %v268 = vld [vmem:[%s258 + $0x20] sm:$0xff]
                %269 = vst [vmem:[%s259 + $0x20] sm:$0xff] %v268
                %v270 = vld [vmem:[%s258 + $0x28] sm:$0xff]
                %271 = vst [vmem:[%s259 + $0x28] sm:$0xff] %v270
                %v272 = vld [vmem:[%s258 + $0x30] sm:$0xff]
                %273 = vst [vmem:[%s259 + $0x30] sm:$0xff] %v272
                %v274 = vld [vmem:[%s258 + $0x38] sm:$0xff]
                %275 = vst [vmem:[%s259 + $0x38] sm:$0xff] %v274
                %v276 = vld [vmem:[%s258 + $0x80] sm:$0xff]
                %277 = vst [vmem:[%s259 + $0x40] sm:$0xff] %v276
                %v278 = vld [vmem:[%s258 + $0x88] sm:$0xff]
                %279 = vst [vmem:[%s259 + $0x48] sm:$0xff] %v278
                %v280 = vld [vmem:[%s258 + $0x90] sm:$0xff]
                %281 = vst [vmem:[%s259 + $0x50] sm:$0xff] %v280
                %v282 = vld [vmem:[%s258 + $0x98] sm:$0xff]
                %283 = vst [vmem:[%s259 + $0x58] sm:$0xff] %v282
                %v284 = vld [vmem:[%s258 + $0xa0] sm:$0xff]
                %285 = vst [vmem:[%s259 + $0x60] sm:$0xff] %v284
                %v286 = vld [vmem:[%s258 + $0xa8] sm:$0xff]
                %287 = vst [vmem:[%s259 + $0x68] sm:$0xff] %v286
                %v288 = vld [vmem:[%s258 + $0xb0] sm:$0xff]
                %289 = vst [vmem:[%s259 + $0x70] sm:$0xff] %v288
                %v290 = vld [vmem:[%s258 + $0xb8] sm:$0xff]
                %291 = vst [vmem:[%s259 + $0x78] sm:$0xff] %v290
                %v292 = vld [vmem:[%s258 + $0x100] sm:$0xff]
                %293 = vst [vmem:[%s259 + $0x80] sm:$0xff] %v292
                %v294 = vld [vmem:[%s258 + $0x108] sm:$0xff]
                %295 = vst [vmem:[%s259 + $0x88] sm:$0xff] %v294
                %v296 = vld [vmem:[%s258 + $0x110] sm:$0xff]
                %297 = vst [vmem:[%s259 + $0x90] sm:$0xff] %v296
                %v298 = vld [vmem:[%s258 + $0x118] sm:$0xff]
                %299 = vst [vmem:[%s259 + $0x98] sm:$0xff] %v298
                %v300 = vld [vmem:[%s258 + $0x120] sm:$0xff]
                %301 = vst [vmem:[%s259 + $0xa0] sm:$0xff] %v300
                %v302 = vld [vmem:[%s258 + $0x128] sm:$0xff]
                %303 = vst [vmem:[%s259 + $0xa8] sm:$0xff] %v302
                %v304 = vld [vmem:[%s258 + $0x130] sm:$0xff]
                %305 = vst [vmem:[%s259 + $0xb0] sm:$0xff] %v304
                %v306 = vld [vmem:[%s258 + $0x138] sm:$0xff]
                %307 = vst [vmem:[%s259 + $0xb8] sm:$0xff] %v306
                %v308 = vld [vmem:[%s258 + $0x180] sm:$0xff]
                %309 = vst [vmem:[%s259 + $0xc0] sm:$0xff] %v308
                %v310 = vld [vmem:[%s258 + $0x188] sm:$0xff]
                %311 = vst [vmem:[%s259 + $0xc8] sm:$0xff] %v310
                %v312 = vld [vmem:[%s258 + $0x190] sm:$0xff]
                %313 = vst [vmem:[%s259 + $0xd0] sm:$0xff] %v312
                %v314 = vld [vmem:[%s258 + $0x198] sm:$0xff]
                %315 = vst [vmem:[%s259 + $0xd8] sm:$0xff] %v314
                %v316 = vld [vmem:[%s258 + $0x1a0] sm:$0xff]
                %317 = vst [vmem:[%s259 + $0xe0] sm:$0xff] %v316
                %v318 = vld [vmem:[%s258 + $0x1a8] sm:$0xff]
                %319 = vst [vmem:[%s259 + $0xe8] sm:$0xff] %v318
                %v320 = vld [vmem:[%s258 + $0x1b0] sm:$0xff]
                %321 = vst [vmem:[%s259 + $0xf0] sm:$0xff] %v320
                %v322 = vld [vmem:[%s258 + $0x1b8] sm:$0xff]
                %323 = vst [vmem:[%s259 + $0xf8] sm:$0xff] %v322
              $region57: #{conv_caps_forward.1} parent=51 // loop_footer
                %s257 = sadd.s32 1, %s253
              $region58: #{conv_caps_forward.1} parent=51 // loop_footer_branch
                %252 = sbr.rel target = $region54
              $region59: #{conv_caps_forward.1} parent=51 // loop_exit
                _
            $region52: #{conv_caps_forward.1} parent=43 // pred_fallthru
              _
          $region44: #{conv_caps_forward.1} parent=39 // pred_fallthru
            _
          %400 = vnop
        $region40: #{conv_caps_forward.1} parent=35 // pred_fallthru
          _
      $region36: #{conv_caps_forward.1} parent=5 // pred_fallthru
        _
      %p401 = scmp.le.s32.totalorder 1, %s17
      %p402 = scmp.lt.s32.totalorder %s17, 3
      %p403 = pnand %p401, %p402
      %p404 = pneg %p403
      // Predicated region
      $region75: #{conv_caps_forward.1} parent=5 // pred_check
        _
      $region76: #{conv_caps_forward.1} parent=5 // pred_check_branch
        %406 = sbr.rel (%p403) target = $region78
      $region77: #{conv_caps_forward.1} parent=5 // pred_region
        %s407 = ssub.s32 %s17, 1
        %s408 = sand.u32 %s30, 1
        %s409 = sand.u32 %s30, 1
        %s410 = smul.addr %s409, 256
        %s411 = scalar_lea.vmem [#allocation2], %s410
        // Predicated region
        $region79: #{conv_caps_forward.1} parent=77 // pred_check
          %p412 = pneg %p43
        $region80: #{conv_caps_forward.1} parent=77 // pred_check_branch
          %414 = sbr.rel (%p412) target = $region82
        $region81: #{conv_caps_forward.1} parent=77 // pred_region
          _
        $region82: #{conv_caps_forward.1} parent=77 // pred_fallthru
          _
        %s415 = sand.u32 %s30, 1
        %s416 = sand.u32 %s30, 1
        %s417 = smul.addr %s416, 256
        %s418 = scalar_lea.vmem [#allocation2], %s417
        %p419 = pneg %p43
        %p420 = pneg %p40
        %p421 = pneg %p64
        %p422 = pneg %p61
        %p423 = pneg %p85
        %p424 = pneg %p82
        %p425 = pneg %p106
        %p426 = pneg %p103
        %p427 = pneg %p127
        %p428 = pneg %p124
        %p429 = pneg %p148
        %p430 = pneg %p145
        %p431 = pneg %p174
        %p432 = pneg %p171
        %s433 = sand.u32 %s161, 1
        %s434 = sand.u32 %s161, 1
        %s435 = smul.addr %s434, 256
        %s436 = scalar_lea.vmem [#allocation3], %s435
        %p437 = pneg %p200
        %p438 = pneg %p197
        %s439 = sand.u32 %s187, 1
        %s440 = scalar_lea.sflag [#allocation5], %s439
        %s441 = sand.u32 %s187, 1
        %s442 = smul.addr %s441, 64
        %s443 = scalar_lea.vmem [#allocation4], %s442
        %s444 = smul.u32 8, %s22
        %s445 = smul.u32 8, %s22
        %s446 = smul.u32 8, %s22
        %v448 = vld [vmem:[%s411] sm:$0xff]
        %v449 = vld [vmem:[%s411 + $0x8] sm:$0xff]
        %v450 = vld [vmem:[%s411 + $0x10] sm:$0xff]
        %v451 = vld [vmem:[%s411 + $0x18] sm:$0xff]
        %v452 = vld [vmem:[%s411 + $0x20] sm:$0xff]
        %v453 = vld [vmem:[%s411 + $0x28] sm:$0xff]
        %v454 = vld [vmem:[%s411 + $0x30] sm:$0xff]
        %v455 = vld [vmem:[%s411 + $0x38] sm:$0xff]
        %v456 = vld [vmem:[%s1] sm:$0xff]
        %v457 = vld [vmem:[%s1 + $0x8] sm:$0xff]
        %v458 = vld [vmem:[%s1 + $0x10] sm:$0xff]
        %v459 = vld [vmem:[%s1 + $0x18] sm:$0xff]
        %v460 = vld [vmem:[%s1 + $0x20] sm:$0xff]
        %v461 = vld [vmem:[%s1 + $0x28] sm:$0xff]
        %v462 = vld [vmem:[%s1 + $0x30] sm:$0xff]
        %v463 = vld [vmem:[%s1 + $0x38] sm:$0xff]
        %v464 = vld [vmem:[%s1 + $0x40] sm:$0xff]
        %v465 = vld [vmem:[%s1 + $0x48] sm:$0xff]
        %v466 = vld [vmem:[%s1 + $0x50] sm:$0xff]
        %v467 = vld [vmem:[%s1 + $0x58] sm:$0xff]
        %v468 = vld [vmem:[%s1 + $0x60] sm:$0xff]
        %v469 = vld [vmem:[%s1 + $0x68] sm:$0xff]
        %v470 = vld [vmem:[%s1 + $0x70] sm:$0xff]
        %v471 = vld [vmem:[%s1 + $0x78] sm:$0xff]
        %v472 = vld [vmem:[%s1 + $0x80] sm:$0xff]
        %v473 = vld [vmem:[%s1 + $0x88] sm:$0xff]
        %v482 = vunpack.c.l.b16 %v448
        %v483 = vunpack.c.h.b16 %v448
        %v484 = vunpack.c.l.b16 %v449
        %v485 = vunpack.c.h.b16 %v449
        %v486 = vunpack.c.l.b16 %v450
        %v487 = vunpack.c.h.b16 %v450
        %v488 = vunpack.c.l.b16 %v451
        %v489 = vunpack.c.h.b16 %v451
        %v490 = vunpack.c.l.b16 %v452
        %v491 = vunpack.c.h.b16 %v452
        %v492 = vunpack.c.l.b16 %v453
        %v493 = vunpack.c.h.b16 %v453
        %v494 = vunpack.c.l.b16 %v454
        %v495 = vunpack.c.h.b16 %v454
        %v496 = vunpack.c.l.b16 %v455
        %v497 = vunpack.c.h.b16 %v455
        %v498 = vpack.c.b16 %v484, %v482
        %v499 = vpack.c.b16 %v485, %v483
        %v500 = vpack.c.b16 %v488, %v486
        %v501 = vpack.c.b16 %v489, %v487
        %v502 = vpack.c.b16 %v492, %v490
        %v503 = vpack.c.b16 %v493, %v491
        %v504 = vpack.c.b16 %v496, %v494
        %v505 = vpack.c.b16 %v497, %v495
        %v528 = vunpack.c.l.b16 %v456
        %v529 = vunpack.c.h.b16 %v456
        %v530 = vunpack.c.l.b16 %v457
        %v531 = vunpack.c.h.b16 %v457
        %v532 = vunpack.c.l.b16 %v458
        %v533 = vunpack.c.h.b16 %v458
        %v534 = vunpack.c.l.b16 %v459
        %v535 = vunpack.c.h.b16 %v459
        %v536 = vunpack.c.l.b16 %v460
        %v537 = vunpack.c.h.b16 %v460
        %v538 = vunpack.c.l.b16 %v461
        %v539 = vunpack.c.h.b16 %v461
        %v540 = vunpack.c.l.b16 %v462
        %v541 = vunpack.c.h.b16 %v462
        %v542 = vunpack.c.l.b16 %v463
        %v543 = vunpack.c.h.b16 %v463
        %v544 = vunpack.c.l.b16 %v464
        %v545 = vunpack.c.h.b16 %v464
        %v546 = vunpack.c.l.b16 %v465
        %v547 = vunpack.c.h.b16 %v465
        %v548 = vunpack.c.l.b16 %v466
        %v549 = vunpack.c.h.b16 %v466
        %v550 = vunpack.c.l.b16 %v467
        %v551 = vunpack.c.h.b16 %v467
        %v552 = vunpack.c.l.b16 %v468
        %v553 = vunpack.c.h.b16 %v468
        %v554 = vunpack.c.l.b16 %v469
        %v555 = vunpack.c.h.b16 %v469
        %v556 = vunpack.c.l.b16 %v470
        %v557 = vunpack.c.h.b16 %v470
        %v558 = vunpack.c.l.b16 %v471
        %v559 = vunpack.c.h.b16 %v471
        %v560 = vunpack.c.l.b16 %v472
        %v561 = vunpack.c.h.b16 %v472
        %v562 = vunpack.c.l.b16 %v473
        %v563 = vunpack.c.h.b16 %v473
        %v564 = vpack.c.b16 %v530, %v528
        %v565 = vpack.c.b16 %v531, %v529
        %v566 = vpack.c.b16 %v534, %v532
        %v567 = vpack.c.b16 %v535, %v533
        %v568 = vpack.c.b16 %v538, %v536
        %v569 = vpack.c.b16 %v539, %v537
        %v570 = vpack.c.b16 %v542, %v540
        %v571 = vpack.c.b16 %v543, %v541
        %v572 = vpack.c.b16 %v546, %v544
        %v573 = vpack.c.b16 %v547, %v545
        %v574 = vpack.c.b16 %v550, %v548
        %v575 = vpack.c.b16 %v551, %v549
        %v576 = vpack.c.b16 %v554, %v552
        %v577 = vpack.c.b16 %v555, %v553
        %v578 = vpack.c.b16 %v558, %v556
        %v579 = vpack.c.b16 %v559, %v557
        %v580 = vpack.c.b16 %v562, %v560
        %v581 = vpack.c.b16 %v563, %v561
        %vm600 = vcmask 130048
        %v602 = vsel %vm600, %v499, 0
        %v605 = vsel %vm600, %v501, 0
        %v608 = vsel %vm600, %v503, 0
        %v611 = vsel %vm600, %v505, 0
        %613 = vmatprep.subr.bf16.mxu0 %v565
        %614 = vmatpush1.bf16.msra.mxu0 %v564
        %615 = vmatprep.subr.bf16.mxu0 %v567
        %616 = vmatpush1.bf16.msra.mxu0 %v566
        %617 = vmatprep.subr.bf16.mxu0 %v569
        %618 = vmatpush1.bf16.msra.mxu0 %v568
        %619 = vmatprep.subr.bf16.mxu0 %v571
        %620 = vmatpush1.bf16.msra.mxu0 %v570
        %621 = vmatprep.subr.bf16.mxu0 %v573
        %622 = vmatpush1.bf16.msra.mxu0 %v572
        %623 = vmatprep.subr.bf16.mxu0 %v575
        %624 = vmatpush1.bf16.msra.mxu0 %v574
        %625 = vmatprep.subr.bf16.mxu0 %v577
        %626 = vmatpush1.bf16.msra.mxu0 %v576
        %627 = vmatprep.subr.bf16.mxu0 %v579
        %628 = vmatpush1.bf16.msra.mxu0 %v578
        %629 = vmatprep.subr.bf16.mxu0 %v581
        %630 = vmatpush1.bf16.msra.mxu0 %v580
        %631 = vmatprep.subr.bf16.mxu0 0
        %632 = vmatpush1.bf16.msra.mxu0 0
        %633 = vmatprep.subr.bf16.mxu0 0
        %634 = vmatpush1.bf16.msra.mxu0 0
        %635 = vmatprep.subr.bf16.mxu0 0
        %636 = vmatpush1.bf16.msra.mxu0 0
        %637 = vmatprep.subr.bf16.mxu0 0
        %638 = vmatpush1.bf16.msra.mxu0 0
        %639 = vmatprep.subr.bf16.mxu0 0
        %640 = vmatpush1.bf16.msra.mxu0 0
        %641 = vmatprep.subr.bf16.mxu0 0
        %642 = vmatpush1.bf16.msra.mxu0 0
        %643 = vmatprep.subr.bf16.mxu0 0
        %644 = vmatpush1.bf16.msra.mxu0 0
        %645 = vmatprep.mubr.bf16.mxu0 %v602
        %646 = vmatmul.mubr.bf16.gmra.mrb[0].mxu0 %v498
        %v647 = vpop.f32.mrb[0].mxu0
        %v648 = vadd.f32 0.0, %v647
        %v649 = vpop.f32.mrb[0].mxu0
        %v650 = vadd.f32 0.0, %v649
        %v651 = vpop.f32.mrb[0].mxu0
        %v652 = vadd.f32 0.0, %v651
        %v653 = vpop.f32.mrb[0].mxu0
        %v654 = vadd.f32 0.0, %v653
        %655 = vmatprep.mubr.bf16.mxu0 %v605
        %656 = vmatmul.mubr.bf16.gmra.mrb[0].mxu0 %v500
        %v657 = vpop.f32.mrb[0].mxu0
        %v658 = vadd.f32 0.0, %v657
        %v659 = vpop.f32.mrb[0].mxu0
        %v660 = vadd.f32 0.0, %v659
        %v661 = vpop.f32.mrb[0].mxu0
        %v662 = vadd.f32 0.0, %v661
        %v663 = vpop.f32.mrb[0].mxu0
        %v664 = vadd.f32 0.0, %v663
        %665 = vmatprep.mubr.bf16.mxu0 %v608
        %666 = vmatmul.mubr.bf16.gmra.mrb[0].mxu0 %v502
        %v667 = vpop.f32.mrb[0].mxu0
        %v668 = vadd.f32 0.0, %v667
        %v669 = vpop.f32.mrb[0].mxu0
        %v670 = vadd.f32 0.0, %v669
        %v671 = vpop.f32.mrb[0].mxu0
        %v672 = vadd.f32 0.0, %v671
        %v673 = vpop.f32.mrb[0].mxu0
        %v674 = vadd.f32 0.0, %v673
        %675 = vmatprep.mubr.bf16.mxu0 %v611
        %676 = vmatmul.mubr.bf16.gmra.mrb[0].mxu0 %v504
        %v677 = vpop.f32.mrb[0].mxu0
        %v678 = vadd.f32 0.0, %v677
        %v679 = vpop.f32.mrb[0].mxu0
        %v680 = vadd.f32 0.0, %v679
        %v681 = vpop.f32.mrb[0].mxu0
        %v682 = vadd.f32 0.0, %v681
        %v683 = vpop.f32.mrb[0].mxu0
        %v684 = vadd.f32 0.0, %v683
        %685 = vdwg.mxu0
        %v686 = vpack.c.bf16 %v652, %v648
        %v687 = vpack.c.bf16 %v654, %v650
        %v688 = vpack.c.bf16 %v662, %v658
        %v689 = vpack.c.bf16 %v664, %v660
        %v690 = vpack.c.bf16 %v672, %v668
        %v691 = vpack.c.bf16 %v674, %v670
        %v692 = vpack.c.bf16 %v682, %v678
        %v693 = vpack.c.bf16 %v684, %v680
        %v702 = vunpack.c.l.b16 %v686
        %v703 = vunpack.c.l.b16 %v687
        %v704 = vunpack.c.h.b16 %v686
        %v705 = vunpack.c.h.b16 %v687
        %v706 = vunpack.c.l.b16 %v688
        %v707 = vunpack.c.l.b16 %v689
        %v708 = vunpack.c.h.b16 %v688
        %v709 = vunpack.c.h.b16 %v689
        %v710 = vunpack.c.l.b16 %v690
        %v711 = vunpack.c.l.b16 %v691
        %v712 = vunpack.c.h.b16 %v690
        %v713 = vunpack.c.h.b16 %v691
        %v714 = vunpack.c.l.b16 %v692
        %v715 = vunpack.c.l.b16 %v693
        %v716 = vunpack.c.h.b16 %v692
        %v717 = vunpack.c.h.b16 %v693
        %v718 = vpack.c.b16 %v703, %v702
        %v719 = vpack.c.b16 %v705, %v704
        %v720 = vpack.c.b16 %v707, %v706
        %v721 = vpack.c.b16 %v709, %v708
        %v722 = vpack.c.b16 %v711, %v710
        %v723 = vpack.c.b16 %v713, %v712
        %v724 = vpack.c.b16 %v715, %v714
        %v725 = vpack.c.b16 %v717, %v716
        %vm734 = vcmask 1043456
        %vm735 = vcmask 130052
        %vm736 = vmor %vm735, %vm734
        %737 = vst.msk [vmem:[%s436] sm:$0xff] %vm736, %v718
        %738 = vst.msk [vmem:[%s436 + $0x8] sm:$0xff] %vm736, %v719
        %739 = vst.msk [vmem:[%s436 + $0x10] sm:$0xff] %vm736, %v720
        %740 = vst.msk [vmem:[%s436 + $0x18] sm:$0xff] %vm736, %v721
        %741 = vst.msk [vmem:[%s436 + $0x20] sm:$0xff] %vm736, %v722
        %742 = vst.msk [vmem:[%s436 + $0x28] sm:$0xff] %vm736, %v723
        %743 = vst.msk [vmem:[%s436 + $0x30] sm:$0xff] %vm736, %v724
        %744 = vst.msk [vmem:[%s436 + $0x38] sm:$0xff] %vm736, %v725
        %v745 = vld [vmem:[%s2] sm:$0xff]
        %v746 = vld [vmem:[%s2 + $0x8] sm:$0xff]
        %v747 = vld [vmem:[%s2 + $0x10] sm:$0xff]
        %v748 = vld [vmem:[%s2 + $0x18] sm:$0xff]
        %v749 = vld [vmem:[%s2 + $0x20] sm:$0xff]
        %v750 = vld [vmem:[%s2 + $0x28] sm:$0xff]
        %v751 = vld [vmem:[%s2 + $0x30] sm:$0xff]
        %v752 = vld [vmem:[%s2 + $0x38] sm:$0xff]
        %v753 = vld [vmem:[%s2 + $0x40] sm:$0xff]
        %v754 = vld [vmem:[%s2 + $0x48] sm:$0xff]
        %v755 = vld [vmem:[%s2 + $0x50] sm:$0xff]
        %v756 = vld [vmem:[%s2 + $0x58] sm:$0xff]
        %v757 = vld [vmem:[%s2 + $0x60] sm:$0xff]
        %v758 = vld [vmem:[%s2 + $0x68] sm:$0xff]
        %v759 = vld [vmem:[%s2 + $0x70] sm:$0xff]
        %v760 = vld [vmem:[%s2 + $0x78] sm:$0xff]
        %v761 = vld [vmem:[%s2 + $0x80] sm:$0xff]
        %v762 = vld [vmem:[%s2 + $0x88] sm:$0xff]
        %s763 = scalar_lea.vmem %s411, 64 [#allocation2]
        %v764 = vld [vmem:[%s763] sm:$0xff]
        %v765 = vld [vmem:[%s763 + $0x8] sm:$0xff]
        %v766 = vld [vmem:[%s763 + $0x10] sm:$0xff]
        %v767 = vld [vmem:[%s763 + $0x18] sm:$0xff]
        %v768 = vld [vmem:[%s763 + $0x20] sm:$0xff]
        %v769 = vld [vmem:[%s763 + $0x28] sm:$0xff]
        %v770 = vld [vmem:[%s763 + $0x30] sm:$0xff]
        %v771 = vld [vmem:[%s763 + $0x38] sm:$0xff]
        %v772 = vld [vmem:[%s1] sm:$0xff]
        %v773 = vld [vmem:[%s1 + $0x8] sm:$0xff]
        %v774 = vld [vmem:[%s1 + $0x10] sm:$0xff]
        %v775 = vld [vmem:[%s1 + $0x18] sm:$0xff]
        %v776 = vld [vmem:[%s1 + $0x20] sm:$0xff]
        %v777 = vld [vmem:[%s1 + $0x28] sm:$0xff]
        %v778 = vld [vmem:[%s1 + $0x30] sm:$0xff]
        %v779 = vld [vmem:[%s1 + $0x38] sm:$0xff]
        %v780 = vld [vmem:[%s1 + $0x40] sm:$0xff]
        %v781 = vld [vmem:[%s1 + $0x48] sm:$0xff]
        %v782 = vld [vmem:[%s1 + $0x50] sm:$0xff]
        %v783 = vld [vmem:[%s1 + $0x58] sm:$0xff]
        %v784 = vld [vmem:[%s1 + $0x60] sm:$0xff]
        %v785 = vld [vmem:[%s1 + $0x68] sm:$0xff]
        %v786 = vld [vmem:[%s1 + $0x70] sm:$0xff]
        %v787 = vld [vmem:[%s1 + $0x78] sm:$0xff]
        %v788 = vld [vmem:[%s1 + $0x80] sm:$0xff]
        %v789 = vld [vmem:[%s1 + $0x88] sm:$0xff]
        %v798 = vunpack.c.l.b16 %v764
        %v799 = vunpack.c.h.b16 %v764
        %v800 = vunpack.c.l.b16 %v765
        %v801 = vunpack.c.h.b16 %v765
        %v802 = vunpack.c.l.b16 %v766
        %v803 = vunpack.c.h.b16 %v766
        %v804 = vunpack.c.l.b16 %v767
        %v805 = vunpack.c.h.b16 %v767
        %v806 = vunpack.c.l.b16 %v768
        %v807 = vunpack.c.h.b16 %v768
        %v808 = vunpack.c.l.b16 %v769
        %v809 = vunpack.c.h.b16 %v769
        %v810 = vunpack.c.l.b16 %v770
        %v811 = vunpack.c.h.b16 %v770
        %v812 = vunpack.c.l.b16 %v771
        %v813 = vunpack.c.h.b16 %v771
        %v814 = vpack.c.b16 %v800, %v798
        %v815 = vpack.c.b16 %v801, %v799
        %v816 = vpack.c.b16 %v804, %v802
        %v817 = vpack.c.b16 %v805, %v803
        %v818 = vpack.c.b16 %v808, %v806
        %v819 = vpack.c.b16 %v809, %v807
        %v820 = vpack.c.b16 %v812, %v810
        %v821 = vpack.c.b16 %v813, %v811
        %v844 = vunpack.c.l.b16 %v772
        %v845 = vunpack.c.h.b16 %v772
        %v846 = vunpack.c.l.b16 %v773
        %v847 = vunpack.c.h.b16 %v773
        %v848 = vunpack.c.l.b16 %v774
        %v849 = vunpack.c.h.b16 %v774
        %v850 = vunpack.c.l.b16 %v775
        %v851 = vunpack.c.h.b16 %v775
        %v852 = vunpack.c.l.b16 %v776
        %v853 = vunpack.c.h.b16 %v776
        %v854 = vunpack.c.l.b16 %v777
        %v855 = vunpack.c.h.b16 %v777
        %v856 = vunpack.c.l.b16 %v778
        %v857 = vunpack.c.h.b16 %v778
        %v858 = vunpack.c.l.b16 %v779
        %v859 = vunpack.c.h.b16 %v779
        %v860 = vunpack.c.l.b16 %v780
        %v861 = vunpack.c.h.b16 %v780
        %v862 = vunpack.c.l.b16 %v781
        %v863 = vunpack.c.h.b16 %v781
        %v864 = vunpack.c.l.b16 %v782
        %v865 = vunpack.c.h.b16 %v782
        %v866 = vunpack.c.l.b16 %v783
        %v867 = vunpack.c.h.b16 %v783
        %v868 = vunpack.c.l.b16 %v784
        %v869 = vunpack.c.h.b16 %v784
        %v870 = vunpack.c.l.b16 %v785
        %v871 = vunpack.c.h.b16 %v785
        %v872 = vunpack.c.l.b16 %v786
        %v873 = vunpack.c.h.b16 %v786
        %v874 = vunpack.c.l.b16 %v787
        %v875 = vunpack.c.h.b16 %v787
        %v876 = vunpack.c.l.b16 %v788
        %v877 = vunpack.c.h.b16 %v788
        %v878 = vunpack.c.l.b16 %v789
        %v879 = vunpack.c.h.b16 %v789
        %v880 = vpack.c.b16 %v846, %v844
        %v881 = vpack.c.b16 %v847, %v845
        %v882 = vpack.c.b16 %v850, %v848
        %v883 = vpack.c.b16 %v851, %v849
        %v884 = vpack.c.b16 %v854, %v852
        %v885 = vpack.c.b16 %v855, %v853
        %v886 = vpack.c.b16 %v858, %v856
        %v887 = vpack.c.b16 %v859, %v857
        %v888 = vpack.c.b16 %v862, %v860
        %v889 = vpack.c.b16 %v863, %v861
        %v890 = vpack.c.b16 %v866, %v864
        %v891 = vpack.c.b16 %v867, %v865
        %v892 = vpack.c.b16 %v870, %v868
        %v893 = vpack.c.b16 %v871, %v869
        %v894 = vpack.c.b16 %v874, %v872
        %v895 = vpack.c.b16 %v875, %v873
        %v896 = vpack.c.b16 %v878, %v876
        %v897 = vpack.c.b16 %v879, %v877
        %v917 = vsel %vm600, %v815, 0
        %v920 = vsel %vm600, %v817, 0
        %v923 = vsel %vm600, %v819, 0
        %v926 = vsel %vm600, %v821, 0
        %928 = vmatprep.subr.bf16.mxu0 %v881
        %929 = vmatpush1.bf16.msra.mxu0 %v880
        %930 = vmatprep.subr.bf16.mxu0 %v883
        %931 = vmatpush1.bf16.msra.mxu0 %v882
        %932 = vmatprep.subr.bf16.mxu0 %v885
        %933 = vmatpush1.bf16.msra.mxu0 %v884
        %934 = vmatprep.subr.bf16.mxu0 %v887
        %935 = vmatpush1.bf16.msra.mxu0 %v886
        %936 = vmatprep.subr.bf16.mxu0 %v889
        %937 = vmatpush1.bf16.msra.mxu0 %v888
        %938 = vmatprep.subr.bf16.mxu0 %v891
        %939 = vmatpush1.bf16.msra.mxu0 %v890
        %940 = vmatprep.subr.bf16.mxu0 %v893
        %941 = vmatpush1.bf16.msra.mxu0 %v892
        %942 = vmatprep.subr.bf16.mxu0 %v895
        %943 = vmatpush1.bf16.msra.mxu0 %v894
        %944 = vmatprep.subr.bf16.mxu0 %v897
        %945 = vmatpush1.bf16.msra.mxu0 %v896
        %946 = vmatprep.subr.bf16.mxu0 0
        %947 = vmatpush1.bf16.msra.mxu0 0
        %948 = vmatprep.subr.bf16.mxu0 0
        %949 = vmatpush1.bf16.msra.mxu0 0
        %950 = vmatprep.subr.bf16.mxu0 0
        %951 = vmatpush1.bf16.msra.mxu0 0
        %952 = vmatprep.subr.bf16.mxu0 0
        %953 = vmatpush1.bf16.msra.mxu0 0
        %954 = vmatprep.subr.bf16.mxu0 0
        %955 = vmatpush1.bf16.msra.mxu0 0
        %956 = vmatprep.subr.bf16.mxu0 0
        %957 = vmatpush1.bf16.msra.mxu0 0
        %958 = vmatprep.subr.bf16.mxu0 0
        %959 = vmatpush1.bf16.msra.mxu0 0
        %960 = vmatprep.mubr.bf16.mxu0 %v917
        %961 = vmatmul.mubr.bf16.gmra.mrb[0].mxu0 %v814
        %v962 = vpop.f32.mrb[0].mxu0
        %v963 = vadd.f32 0.0, %v962
        %v964 = vpop.f32.mrb[0].mxu0
        %v965 = vadd.f32 0.0, %v964
        %v966 = vpop.f32.mrb[0].mxu0
        %v967 = vadd.f32 0.0, %v966
        %v968 = vpop.f32.mrb[0].mxu0
        %v969 = vadd.f32 0.0, %v968
        %970 = vmatprep.mubr.bf16.mxu0 %v920
        %971 = vmatmul.mubr.bf16.gmra.mrb[0].mxu0 %v816
        %v972 = vpop.f32.mrb[0].mxu0
        %v973 = vadd.f32 0.0, %v972
        %v974 = vpop.f32.mrb[0].mxu0
        %v975 = vadd.f32 0.0, %v974
        %v976 = vpop.f32.mrb[0].mxu0
        %v977 = vadd.f32 0.0, %v976
        %v978 = vpop.f32.mrb[0].mxu0
        %v979 = vadd.f32 0.0, %v978
        %980 = vmatprep.mubr.bf16.mxu0 %v923
        %981 = vmatmul.mubr.bf16.gmra.mrb[0].mxu0 %v818
        %v982 = vpop.f32.mrb[0].mxu0
        %v983 = vadd.f32 0.0, %v982
        %v984 = vpop.f32.mrb[0].mxu0
        %v985 = vadd.f32 0.0, %v984
        %v986 = vpop.f32.mrb[0].mxu0
        %v987 = vadd.f32 0.0, %v986
        %v988 = vpop.f32.mrb[0].mxu0
        %v989 = vadd.f32 0.0, %v988
        %990 = vmatprep.mubr.bf16.mxu0 %v926
        %991 = vmatmul.mubr.bf16.gmra.mrb[0].mxu0 %v820
        %v992 = vpop.f32.mrb[0].mxu0
        %v993 = vadd.f32 0.0, %v992
        %v994 = vpop.f32.mrb[0].mxu0
        %v995 = vadd.f32 0.0, %v994
        %v996 = vpop.f32.mrb[0].mxu0
        %v997 = vadd.f32 0.0, %v996
        %v998 = vpop.f32.mrb[0].mxu0
        %v999 = vadd.f32 0.0, %v998
        %1000 = vdwg.mxu0
        %v1001 = vpack.c.bf16 %v967, %v963
        %v1002 = vpack.c.bf16 %v969, %v965
        %v1003 = vpack.c.bf16 %v977, %v973
        %v1004 = vpack.c.bf16 %v979, %v975
        %v1005 = vpack.c.bf16 %v987, %v983
        %v1006 = vpack.c.bf16 %v989, %v985
        %v1007 = vpack.c.bf16 %v997, %v993
        %v1008 = vpack.c.bf16 %v999, %v995
        %v1017 = vunpack.c.l.b16 %v1001
        %v1018 = vunpack.c.l.b16 %v1002
        %v1019 = vunpack.c.h.b16 %v1001
        %v1020 = vunpack.c.h.b16 %v1002
        %v1021 = vunpack.c.l.b16 %v1003
        %v1022 = vunpack.c.l.b16 %v1004
        %v1023 = vunpack.c.h.b16 %v1003
        %v1024 = vunpack.c.h.b16 %v1004
        %v1025 = vunpack.c.l.b16 %v1005
        %v1026 = vunpack.c.l.b16 %v1006
        %v1027 = vunpack.c.h.b16 %v1005
        %v1028 = vunpack.c.h.b16 %v1006
        %v1029 = vunpack.c.l.b16 %v1007
        %v1030 = vunpack.c.l.b16 %v1008
        %v1031 = vunpack.c.h.b16 %v1007
        %v1032 = vunpack.c.h.b16 %v1008
        %v1033 = vpack.c.b16 %v1018, %v1017
        %v1034 = vpack.c.b16 %v1020, %v1019
        %v1035 = vpack.c.b16 %v1022, %v1021
        %v1036 = vpack.c.b16 %v1024, %v1023
        %v1037 = vpack.c.b16 %v1026, %v1025
        %v1038 = vpack.c.b16 %v1028, %v1027
        %v1039 = vpack.c.b16 %v1030, %v1029
        %v1040 = vpack.c.b16 %v1032, %v1031
        %s1049 = scalar_lea.vmem %s436, 64 [#allocation3]
        %1050 = vst.msk [vmem:[%s1049] sm:$0xff] %vm736, %v1033
        %1051 = vst.msk [vmem:[%s1049 + $0x8] sm:$0xff] %vm736, %v1034
        %1052 = vst.msk [vmem:[%s1049 + $0x10] sm:$0xff] %vm736, %v1035
        %1053 = vst.msk [vmem:[%s1049 + $0x18] sm:$0xff] %vm736, %v1036
        %1054 = vst.msk [vmem:[%s1049 + $0x20] sm:$0xff] %vm736, %v1037
        %1055 = vst.msk [vmem:[%s1049 + $0x28] sm:$0xff] %vm736, %v1038
        %1056 = vst.msk [vmem:[%s1049 + $0x30] sm:$0xff] %vm736, %v1039
        %1057 = vst.msk [vmem:[%s1049 + $0x38] sm:$0xff] %vm736, %v1040
        %s1058 = scalar_lea.vmem %s2, 144
        %v1059 = vld [vmem:[%s1058] sm:$0xff]
        %v1060 = vld [vmem:[%s1058 + $0x8] sm:$0xff]
        %v1061 = vld [vmem:[%s1058 + $0x10] sm:$0xff]
        %v1062 = vld [vmem:[%s1058 + $0x18] sm:$0xff]
        %v1063 = vld [vmem:[%s1058 + $0x20] sm:$0xff]
        %v1064 = vld [vmem:[%s1058 + $0x28] sm:$0xff]
        %v1065 = vld [vmem:[%s1058 + $0x30] sm:$0xff]
        %v1066 = vld [vmem:[%s1058 + $0x38] sm:$0xff]
        %v1067 = vld [vmem:[%s1058 + $0x40] sm:$0xff]
        %v1068 = vld [vmem:[%s1058 + $0x48] sm:$0xff]
        %v1069 = vld [vmem:[%s1058 + $0x50] sm:$0xff]
        %v1070 = vld [vmem:[%s1058 + $0x58] sm:$0xff]
        %v1071 = vld [vmem:[%s1058 + $0x60] sm:$0xff]
        %v1072 = vld [vmem:[%s1058 + $0x68] sm:$0xff]
        %v1073 = vld [vmem:[%s1058 + $0x70] sm:$0xff]
        %v1074 = vld [vmem:[%s1058 + $0x78] sm:$0xff]
        %v1075 = vld [vmem:[%s1058 + $0x80] sm:$0xff]
        %v1076 = vld [vmem:[%s1058 + $0x88] sm:$0xff]
        %v1095 = vunpack.c.l.b16 %v1059
        %v1096 = vunpack.c.h.b16 %v1059
        %v1097 = vunpack.c.l.b16 %v1060
        %v1098 = vunpack.c.h.b16 %v1060
        %v1099 = vunpack.c.l.b16 %v1061
        %v1100 = vunpack.c.h.b16 %v1061
        %v1101 = vunpack.c.l.b16 %v1062
        %v1102 = vunpack.c.h.b16 %v1062
        %v1103 = vunpack.c.l.b16 %v1063
        %v1104 = vunpack.c.h.b16 %v1063
        %v1105 = vunpack.c.l.b16 %v1064
        %v1106 = vunpack.c.h.b16 %v1064
        %v1107 = vunpack.c.l.b16 %v1065
        %v1108 = vunpack.c.h.b16 %v1065
        %v1109 = vunpack.c.l.b16 %v1066
        %v1110 = vunpack.c.h.b16 %v1066
        %v1111 = vunpack.c.l.b16 %v1067
        %v1112 = vunpack.c.h.b16 %v1067
        %v1113 = vunpack.c.l.b16 %v1068
        %v1114 = vunpack.c.h.b16 %v1068
        %v1115 = vunpack.c.l.b16 %v1069
        %v1116 = vunpack.c.h.b16 %v1069
        %v1117 = vunpack.c.l.b16 %v1070
        %v1118 = vunpack.c.h.b16 %v1070
        %v1119 = vunpack.c.l.b16 %v1071
        %v1120 = vunpack.c.h.b16 %v1071
        %v1121 = vunpack.c.l.b16 %v1072
        %v1122 = vunpack.c.h.b16 %v1072
        %v1123 = vunpack.c.l.b16 %v1073
        %v1124 = vunpack.c.h.b16 %v1073
        %v1125 = vunpack.c.l.b16 %v1074
        %v1126 = vunpack.c.h.b16 %v1074
        %v1127 = vunpack.c.l.b16 %v1075
        %v1128 = vunpack.c.h.b16 %v1075
        %v1129 = vunpack.c.l.b16 %v1076
        %v1130 = vunpack.c.h.b16 %v1076
        %v1131 = vpack.c.b16 %v1097, %v1095
        %v1132 = vpack.c.b16 %v1098, %v1096
        %v1133 = vpack.c.b16 %v1101, %v1099
        %v1134 = vpack.c.b16 %v1102, %v1100
        %v1135 = vpack.c.b16 %v1105, %v1103
        %v1136 = vpack.c.b16 %v1106, %v1104
        %v1137 = vpack.c.b16 %v1109, %v1107
        %v1138 = vpack.c.b16 %v1110, %v1108
        %v1139 = vpack.c.b16 %v1113, %v1111
        %v1140 = vpack.c.b16 %v1114, %v1112
        %v1141 = vpack.c.b16 %v1117, %v1115
        %v1142 = vpack.c.b16 %v1118, %v1116
        %v1143 = vpack.c.b16 %v1121, %v1119
        %v1144 = vpack.c.b16 %v1122, %v1120
        %v1145 = vpack.c.b16 %v1125, %v1123
        %v1146 = vpack.c.b16 %v1126, %v1124
        %v1147 = vpack.c.b16 %v1129, %v1127
        %v1148 = vpack.c.b16 %v1130, %v1128
        %v1168 = vsel %vm600, %v1002, 0
        %v1171 = vsel %vm600, %v1004, 0
        %v1174 = vsel %vm600, %v1006, 0
        %v1177 = vsel %vm600, %v1008, 0
        %1179 = vmatprep.subr.bf16.mxu0 %v1132
        %1180 = vmatpush1.bf16.msra.mxu0 %v1131
        %1181 = vmatprep.subr.bf16.mxu0 %v1134
        %1182 = vmatpush1.bf16.msra.mxu0 %v1133
        %1183 = vmatprep.subr.bf16.mxu0 %v1136
        %1184 = vmatpush1.bf16.msra.mxu0 %v1135
        %1185 = vmatprep.subr.bf16.mxu0 %v1138
        %1186 = vmatpush1.bf16.msra.mxu0 %v1137
        %1187 = vmatprep.subr.bf16.mxu0 %v1140
        %1188 = vmatpush1.bf16.msra.mxu0 %v1139
        %1189 = vmatprep.subr.bf16.mxu0 %v1142
        %1190 = vmatpush1.bf16.msra.mxu0 %v1141
        %1191 = vmatprep.subr.bf16.mxu0 %v1144
        %1192 = vmatpush1.bf16.msra.mxu0 %v1143
        %1193 = vmatprep.subr.bf16.mxu0 %v1146
        %1194 = vmatpush1.bf16.msra.mxu0 %v1145
        %1195 = vmatprep.subr.bf16.mxu0 %v1148
        %1196 = vmatpush1.bf16.msra.mxu0 %v1147
        %1197 = vmatprep.subr.bf16.mxu0 0
        %1198 = vmatpush1.bf16.msra.mxu0 0
        %1199 = vmatprep.subr.bf16.mxu0 0
        %1200 = vmatpush1.bf16.msra.mxu0 0
        %1201 = vmatprep.subr.bf16.mxu0 0
        %1202 = vmatpush1.bf16.msra.mxu0 0
        %1203 = vmatprep.subr.bf16.mxu0 0
        %1204 = vmatpush1.bf16.msra.mxu0 0
        %1205 = vmatprep.subr.bf16.mxu0 0
        %1206 = vmatpush1.bf16.msra.mxu0 0
        %1207 = vmatprep.subr.bf16.mxu0 0
        %1208 = vmatpush1.bf16.msra.mxu0 0
        %1209 = vmatprep.subr.bf16.mxu0 0
        %1210 = vmatpush1.bf16.msra.mxu0 0
        %1211 = vmatprep.mubr.bf16.mxu0 %v1168
        %1212 = vmatmul.mubr.bf16.gmra.mrb[0].mxu0 %v1001
        %v1213 = vpop.f32.mrb[0].mxu0
        %v1214 = vadd.f32 0.0, %v1213
        %v1215 = vpop.f32.mrb[0].mxu0
        %v1216 = vadd.f32 0.0, %v1215
        %v1217 = vpop.f32.mrb[0].mxu0
        %v1218 = vadd.f32 0.0, %v1217
        %v1219 = vpop.f32.mrb[0].mxu0
        %v1220 = vadd.f32 0.0, %v1219
        %1221 = vmatprep.mubr.bf16.mxu0 %v1171
        %1222 = vmatmul.mubr.bf16.gmra.mrb[0].mxu0 %v1003
        %v1223 = vpop.f32.mrb[0].mxu0
        %v1224 = vadd.f32 0.0, %v1223
        %v1225 = vpop.f32.mrb[0].mxu0
        %v1226 = vadd.f32 0.0, %v1225
        %v1227 = vpop.f32.mrb[0].mxu0
        %v1228 = vadd.f32 0.0, %v1227
        %v1229 = vpop.f32.mrb[0].mxu0
        %v1230 = vadd.f32 0.0, %v1229
        %1231 = vmatprep.mubr.bf16.mxu0 %v1174
        %1232 = vmatmul.mubr.bf16.gmra.mrb[0].mxu0 %v1005
        %v1233 = vpop.f32.mrb[0].mxu0
        %v1234 = vadd.f32 0.0, %v1233
        %v1235 = vpop.f32.mrb[0].mxu0
        %v1236 = vadd.f32 0.0, %v1235
        %v1237 = vpop.f32.mrb[0].mxu0
        %v1238 = vadd.f32 0.0, %v1237
        %v1239 = vpop.f32.mrb[0].mxu0
        %v1240 = vadd.f32 0.0, %v1239
        %1241 = vmatprep.mubr.bf16.mxu0 %v1177
        %1242 = vmatmul.mubr.bf16.gmra.mrb[0].mxu0 %v1007
        %v1243 = vpop.f32.mrb[0].mxu0
        %v1244 = vadd.f32 0.0, %v1243
        %v1245 = vpop.f32.mrb[0].mxu0
        %v1246 = vadd.f32 0.0, %v1245
        %v1247 = vpop.f32.mrb[0].mxu0
        %v1248 = vadd.f32 0.0, %v1247
        %v1249 = vpop.f32.mrb[0].mxu0
        %v1250 = vadd.f32 0.0, %v1249
        %1251 = vdwg.mxu0
        %v1270 = vunpack.c.l.b16 %v745
        %v1271 = vunpack.c.h.b16 %v745
        %v1272 = vunpack.c.l.b16 %v746
        %v1273 = vunpack.c.h.b16 %v746
        %v1274 = vunpack.c.l.b16 %v747
        %v1275 = vunpack.c.h.b16 %v747
        %v1276 = vunpack.c.l.b16 %v748
        %v1277 = vunpack.c.h.b16 %v748
        %v1278 = vunpack.c.l.b16 %v749
        %v1279 = vunpack.c.h.b16 %v749
        %v1280 = vunpack.c.l.b16 %v750
        %v1281 = vunpack.c.h.b16 %v750
        %v1282 = vunpack.c.l.b16 %v751
        %v1283 = vunpack.c.h.b16 %v751
        %v1284 = vunpack.c.l.b16 %v752
        %v1285 = vunpack.c.h.b16 %v752
        %v1286 = vunpack.c.l.b16 %v753
        %v1287 = vunpack.c.h.b16 %v753
        %v1288 = vunpack.c.l.b16 %v754
        %v1289 = vunpack.c.h.b16 %v754
        %v1290 = vunpack.c.l.b16 %v755
        %v1291 = vunpack.c.h.b16 %v755
        %v1292 = vunpack.c.l.b16 %v756
        %v1293 = vunpack.c.h.b16 %v756
        %v1294 = vunpack.c.l.b16 %v757
        %v1295 = vunpack.c.h.b16 %v757
        %v1296 = vunpack.c.l.b16 %v758
        %v1297 = vunpack.c.h.b16 %v758
        %v1298 = vunpack.c.l.b16 %v759
        %v1299 = vunpack.c.h.b16 %v759
        %v1300 = vunpack.c.l.b16 %v760
        %v1301 = vunpack.c.h.b16 %v760
        %v1302 = vunpack.c.l.b16 %v761
        %v1303 = vunpack.c.h.b16 %v761
        %v1304 = vunpack.c.l.b16 %v762
        %v1305 = vunpack.c.h.b16 %v762
        %v1306 = vpack.c.b16 %v1272, %v1270
        %v1307 = vpack.c.b16 %v1273, %v1271
        %v1308 = vpack.c.b16 %v1276, %v1274
        %v1309 = vpack.c.b16 %v1277, %v1275
        %v1310 = vpack.c.b16 %v1280, %v1278
        %v1311 = vpack.c.b16 %v1281, %v1279
        %v1312 = vpack.c.b16 %v1284, %v1282
        %v1313 = vpack.c.b16 %v1285, %v1283
        %v1314 = vpack.c.b16 %v1288, %v1286
        %v1315 = vpack.c.b16 %v1289, %v1287
        %v1316 = vpack.c.b16 %v1292, %v1290
        %v1317 = vpack.c.b16 %v1293, %v1291
        %v1318 = vpack.c.b16 %v1296, %v1294
        %v1319 = vpack.c.b16 %v1297, %v1295
        %v1320 = vpack.c.b16 %v1300, %v1298
        %v1321 = vpack.c.b16 %v1301, %v1299
        %v1322 = vpack.c.b16 %v1304, %v1302
        %v1323 = vpack.c.b16 %v1305, %v1303
        %v1343 = vsel %vm600, %v687, 0
        %v1346 = vsel %vm600, %v689, 0
        %v1349 = vsel %vm600, %v691, 0
        %v1352 = vsel %vm600, %v693, 0
        %1354 = vmatprep.subr.bf16.mxu0 %v1307
        %1355 = vmatpush1.bf16.msra.mxu0 %v1306
        %1356 = vmatprep.subr.bf16.mxu0 %v1309
        %1357 = vmatpush1.bf16.msra.mxu0 %v1308
        %1358 = vmatprep.subr.bf16.mxu0 %v1311
        %1359 = vmatpush1.bf16.msra.mxu0 %v1310
        %1360 = vmatprep.subr.bf16.mxu0 %v1313
        %1361 = vmatpush1.bf16.msra.mxu0 %v1312
        %1362 = vmatprep.subr.bf16.mxu0 %v1315
        %1363 = vmatpush1.bf16.msra.mxu0 %v1314
        %1364 = vmatprep.subr.bf16.mxu0 %v1317
        %1365 = vmatpush1.bf16.msra.mxu0 %v1316
        %1366 = vmatprep.subr.bf16.mxu0 %v1319
        %1367 = vmatpush1.bf16.msra.mxu0 %v1318
        %1368 = vmatprep.subr.bf16.mxu0 %v1321
        %1369 = vmatpush1.bf16.msra.mxu0 %v1320
        %1370 = vmatprep.subr.bf16.mxu0 %v1323
        %1371 = vmatpush1.bf16.msra.mxu0 %v1322
        %1372 = vmatprep.subr.bf16.mxu0 0
        %1373 = vmatpush1.bf16.msra.mxu0 0
        %1374 = vmatprep.subr.bf16.mxu0 0
        %1375 = vmatpush1.bf16.msra.mxu0 0
        %1376 = vmatprep.subr.bf16.mxu0 0
        %1377 = vmatpush1.bf16.msra.mxu0 0
        %1378 = vmatprep.subr.bf16.mxu0 0
        %1379 = vmatpush1.bf16.msra.mxu0 0
        %1380 = vmatprep.subr.bf16.mxu0 0
        %1381 = vmatpush1.bf16.msra.mxu0 0
        %1382 = vmatprep.subr.bf16.mxu0 0
        %1383 = vmatpush1.bf16.msra.mxu0 0
        %1384 = vmatprep.subr.bf16.mxu0 0
        %1385 = vmatpush1.bf16.msra.mxu0 0
        %1386 = vmatprep.mubr.bf16.mxu0 %v1343
        %1387 = vmatmul.mubr.bf16.gmra.mrb[0].mxu0 %v686
        %v1388 = vpop.f32.mrb[0].mxu0
        %v1389 = vadd.f32 %v1214, %v1388
        %v1390 = vpop.f32.mrb[0].mxu0
        %v1391 = vadd.f32 %v1216, %v1390
        %v1392 = vpop.f32.mrb[0].mxu0
        %v1393 = vadd.f32 %v1218, %v1392
        %v1394 = vpop.f32.mrb[0].mxu0
        %v1395 = vadd.f32 %v1220, %v1394
        %1396 = vmatprep.mubr.bf16.mxu0 %v1346
        %1397 = vmatmul.mubr.bf16.gmra.mrb[0].mxu0 %v688
        %v1398 = vpop.f32.mrb[0].mxu0
        %v1399 = vadd.f32 %v1224, %v1398
        %v1400 = vpop.f32.mrb[0].mxu0
        %v1401 = vadd.f32 %v1226, %v1400
        %v1402 = vpop.f32.mrb[0].mxu0
        %v1403 = vadd.f32 %v1228, %v1402
        %v1404 = vpop.f32.mrb[0].mxu0
        %v1405 = vadd.f32 %v1230, %v1404
        %1406 = vmatprep.mubr.bf16.mxu0 %v1349
        %1407 = vmatmul.mubr.bf16.gmra.mrb[0].mxu0 %v690
        %v1408 = vpop.f32.mrb[0].mxu0
        %v1409 = vadd.f32 %v1234, %v1408
        %v1410 = vpop.f32.mrb[0].mxu0
        %v1411 = vadd.f32 %v1236, %v1410
        %v1412 = vpop.f32.mrb[0].mxu0
        %v1413 = vadd.f32 %v1238, %v1412
        %v1414 = vpop.f32.mrb[0].mxu0
        %v1415 = vadd.f32 %v1240, %v1414
        %1416 = vmatprep.mubr.bf16.mxu0 %v1352
        %1417 = vmatmul.mubr.bf16.gmra.mrb[0].mxu0 %v692
        %v1418 = vpop.f32.mrb[0].mxu0
        %v1419 = vadd.f32 %v1244, %v1418
        %v1420 = vpop.f32.mrb[0].mxu0
        %v1421 = vadd.f32 %v1246, %v1420
        %v1422 = vpop.f32.mrb[0].mxu0
        %v1423 = vadd.f32 %v1248, %v1422
        %v1424 = vpop.f32.mrb[0].mxu0
        %v1425 = vadd.f32 %v1250, %v1424
        %1426 = vdwg.mxu0
        %s1427 = scalar_lea.vmem %s411, 128 [#allocation2]
        %v1428 = vld [vmem:[%s1427] sm:$0xff]
        %v1429 = vld [vmem:[%s1427 + $0x8] sm:$0xff]
        %v1430 = vld [vmem:[%s1427 + $0x10] sm:$0xff]
        %v1431 = vld [vmem:[%s1427 + $0x18] sm:$0xff]
        %v1432 = vld [vmem:[%s1427 + $0x20] sm:$0xff]
        %v1433 = vld [vmem:[%s1427 + $0x28] sm:$0xff]
        %v1434 = vld [vmem:[%s1427 + $0x30] sm:$0xff]
        %v1435 = vld [vmem:[%s1427 + $0x38] sm:$0xff]
        %v1436 = vld [vmem:[%s1] sm:$0xff]
        %v1437 = vld [vmem:[%s1 + $0x8] sm:$0xff]
        %v1438 = vld [vmem:[%s1 + $0x10] sm:$0xff]
        %v1439 = vld [vmem:[%s1 + $0x18] sm:$0xff]
        %v1440 = vld [vmem:[%s1 + $0x20] sm:$0xff]
        %v1441 = vld [vmem:[%s1 + $0x28] sm:$0xff]
        %v1442 = vld [vmem:[%s1 + $0x30] sm:$0xff]
        %v1443 = vld [vmem:[%s1 + $0x38] sm:$0xff]
        %v1444 = vld [vmem:[%s1 + $0x40] sm:$0xff]
        %v1445 = vld [vmem:[%s1 + $0x48] sm:$0xff]
        %v1446 = vld [vmem:[%s1 + $0x50] sm:$0xff]
        %v1447 = vld [vmem:[%s1 + $0x58] sm:$0xff]
        %v1448 = vld [vmem:[%s1 + $0x60] sm:$0xff]
        %v1449 = vld [vmem:[%s1 + $0x68] sm:$0xff]
        %v1450 = vld [vmem:[%s1 + $0x70] sm:$0xff]
        %v1451 = vld [vmem:[%s1 + $0x78] sm:$0xff]
        %v1452 = vld [vmem:[%s1 + $0x80] sm:$0xff]
        %v1453 = vld [vmem:[%s1 + $0x88] sm:$0xff]
        %v1462 = vunpack.c.l.b16 %v1428
        %v1463 = vunpack.c.h.b16 %v1428
        %v1464 = vunpack.c.l.b16 %v1429
        %v1465 = vunpack.c.h.b16 %v1429
        %v1466 = vunpack.c.l.b16 %v1430
        %v1467 = vunpack.c.h.b16 %v1430
        %v1468 = vunpack.c.l.b16 %v1431
        %v1469 = vunpack.c.h.b16 %v1431
        %v1470 = vunpack.c.l.b16 %v1432
        %v1471 = vunpack.c.h.b16 %v1432
        %v1472 = vunpack.c.l.b16 %v1433
        %v1473 = vunpack.c.h.b16 %v1433
        %v1474 = vunpack.c.l.b16 %v1434
        %v1475 = vunpack.c.h.b16 %v1434
        %v1476 = vunpack.c.l.b16 %v1435
        %v1477 = vunpack.c.h.b16 %v1435
        %v1478 = vpack.c.b16 %v1464, %v1462
        %v1479 = vpack.c.b16 %v1465, %v1463
        %v1480 = vpack.c.b16 %v1468, %v1466
        %v1481 = vpack.c.b16 %v1469, %v1467
        %v1482 = vpack.c.b16 %v1472, %v1470
        %v1483 = vpack.c.b16 %v1473, %v1471
        %v1484 = vpack.c.b16 %v1476, %v1474
        %v1485 = vpack.c.b16 %v1477, %v1475
        %v1508 = vunpack.c.l.b16 %v1436
        %v1509 = vunpack.c.h.b16 %v1436
        %v1510 = vunpack.c.l.b16 %v1437
        %v1511 = vunpack.c.h.b16 %v1437
        %v1512 = vunpack.c.l.b16 %v1438
        %v1513 = vunpack.c.h.b16 %v1438
        %v1514 = vunpack.c.l.b16 %v1439
        %v1515 = vunpack.c.h.b16 %v1439
        %v1516 = vunpack.c.l.b16 %v1440
        %v1517 = vunpack.c.h.b16 %v1440
        %v1518 = vunpack.c.l.b16 %v1441
        %v1519 = vunpack.c.h.b16 %v1441
        %v1520 = vunpack.c.l.b16 %v1442
        %v1521 = vunpack.c.h.b16 %v1442
        %v1522 = vunpack.c.l.b16 %v1443
        %v1523 = vunpack.c.h.b16 %v1443
        %v1524 = vunpack.c.l.b16 %v1444
        %v1525 = vunpack.c.h.b16 %v1444
        %v1526 = vunpack.c.l.b16 %v1445
        %v1527 = vunpack.c.h.b16 %v1445
        %v1528 = vunpack.c.l.b16 %v1446
        %v1529 = vunpack.c.h.b16 %v1446
        %v1530 = vunpack.c.l.b16 %v1447
        %v1531 = vunpack.c.h.b16 %v1447
        %v1532 = vunpack.c.l.b16 %v1448
        %v1533 = vunpack.c.h.b16 %v1448
        %v1534 = vunpack.c.l.b16 %v1449
        %v1535 = vunpack.c.h.b16 %v1449
        %v1536 = vunpack.c.l.b16 %v1450
        %v1537 = vunpack.c.h.b16 %v1450
        %v1538 = vunpack.c.l.b16 %v1451
        %v1539 = vunpack.c.h.b16 %v1451
        %v1540 = vunpack.c.l.b16 %v1452
        %v1541 = vunpack.c.h.b16 %v1452
        %v1542 = vunpack.c.l.b16 %v1453
        %v1543 = vunpack.c.h.b16 %v1453
        %v1544 = vpack.c.b16 %v1510, %v1508
        %v1545 = vpack.c.b16 %v1511, %v1509
        %v1546 = vpack.c.b16 %v1514, %v1512
        %v1547 = vpack.c.b16 %v1515, %v1513
        %v1548 = vpack.c.b16 %v1518, %v1516
        %v1549 = vpack.c.b16 %v1519, %v1517
        %v1550 = vpack.c.b16 %v1522, %v1520
        %v1551 = vpack.c.b16 %v1523, %v1521
        %v1552 = vpack.c.b16 %v1526, %v1524
        %v1553 = vpack.c.b16 %v1527, %v1525
        %v1554 = vpack.c.b16 %v1530, %v1528
        %v1555 = vpack.c.b16 %v1531, %v1529
        %v1556 = vpack.c.b16 %v1534, %v1532
        %v1557 = vpack.c.b16 %v1535, %v1533
        %v1558 = vpack.c.b16 %v1538, %v1536
        %v1559 = vpack.c.b16 %v1539, %v1537
        %v1560 = vpack.c.b16 %v1542, %v1540
        %v1561 = vpack.c.b16 %v1543, %v1541
        %v1581 = vsel %vm600, %v1479, 0
        %v1584 = vsel %vm600, %v1481, 0
        %v1587 = vsel %vm600, %v1483, 0
        %v1590 = vsel %vm600, %v1485, 0
        %1592 = vmatprep.subr.bf16.mxu0 %v1545
        %1593 = vmatpush1.bf16.msra.mxu0 %v1544
        %1594 = vmatprep.subr.bf16.mxu0 %v1547
        %1595 = vmatpush1.bf16.msra.mxu0 %v1546
        %1596 = vmatprep.subr.bf16.mxu0 %v1549
        %1597 = vmatpush1.bf16.msra.mxu0 %v1548
        %1598 = vmatprep.subr.bf16.mxu0 %v1551
        %1599 = vmatpush1.bf16.msra.mxu0 %v1550
        %1600 = vmatprep.subr.bf16.mxu0 %v1553
        %1601 = vmatpush1.bf16.msra.mxu0 %v1552
        %1602 = vmatprep.subr.bf16.mxu0 %v1555
        %1603 = vmatpush1.bf16.msra.mxu0 %v1554
        %1604 = vmatprep.subr.bf16.mxu0 %v1557
        %1605 = vmatpush1.bf16.msra.mxu0 %v1556
        %1606 = vmatprep.subr.bf16.mxu0 %v1559
        %1607 = vmatpush1.bf16.msra.mxu0 %v1558
        %1608 = vmatprep.subr.bf16.mxu0 %v1561
        %1609 = vmatpush1.bf16.msra.mxu0 %v1560
        %1610 = vmatprep.subr.bf16.mxu0 0
        %1611 = vmatpush1.bf16.msra.mxu0 0
        %1612 = vmatprep.subr.bf16.mxu0 0
        %1613 = vmatpush1.bf16.msra.mxu0 0
        %1614 = vmatprep.subr.bf16.mxu0 0
        %1615 = vmatpush1.bf16.msra.mxu0 0
        %1616 = vmatprep.subr.bf16.mxu0 0
        %1617 = vmatpush1.bf16.msra.mxu0 0
        %1618 = vmatprep.subr.bf16.mxu0 0
        %1619 = vmatpush1.bf16.msra.mxu0 0
        %1620 = vmatprep.subr.bf16.mxu0 0
        %1621 = vmatpush1.bf16.msra.mxu0 0
        %1622 = vmatprep.subr.bf16.mxu0 0
        %1623 = vmatpush1.bf16.msra.mxu0 0
        %1624 = vmatprep.mubr.bf16.mxu0 %v1581
        %1625 = vmatmul.mubr.bf16.gmra.mrb[0].mxu0 %v1478
        %v1626 = vpop.f32.mrb[0].mxu0
        %v1627 = vadd.f32 0.0, %v1626
        %v1628 = vpop.f32.mrb[0].mxu0
        %v1629 = vadd.f32 0.0, %v1628
        %v1630 = vpop.f32.mrb[0].mxu0
        %v1631 = vadd.f32 0.0, %v1630
        %v1632 = vpop.f32.mrb[0].mxu0
        %v1633 = vadd.f32 0.0, %v1632
        %1634 = vmatprep.mubr.bf16.mxu0 %v1584
        %1635 = vmatmul.mubr.bf16.gmra.mrb[0].mxu0 %v1480
        %v1636 = vpop.f32.mrb[0].mxu0
        %v1637 = vadd.f32 0.0, %v1636
        %v1638 = vpop.f32.mrb[0].mxu0
        %v1639 = vadd.f32 0.0, %v1638
        %v1640 = vpop.f32.mrb[0].mxu0
        %v1641 = vadd.f32 0.0, %v1640
        %v1642 = vpop.f32.mrb[0].mxu0
        %v1643 = vadd.f32 0.0, %v1642
        %1644 = vmatprep.mubr.bf16.mxu0 %v1587
        %1645 = vmatmul.mubr.bf16.gmra.mrb[0].mxu0 %v1482
        %v1646 = vpop.f32.mrb[0].mxu0
        %v1647 = vadd.f32 0.0, %v1646
        %v1648 = vpop.f32.mrb[0].mxu0
        %v1649 = vadd.f32 0.0, %v1648
        %v1650 = vpop.f32.mrb[0].mxu0
        %v1651 = vadd.f32 0.0, %v1650
        %v1652 = vpop.f32.mrb[0].mxu0
        %v1653 = vadd.f32 0.0, %v1652
        %1654 = vmatprep.mubr.bf16.mxu0 %v1590
        %1655 = vmatmul.mubr.bf16.gmra.mrb[0].mxu0 %v1484
        %v1656 = vpop.f32.mrb[0].mxu0
        %v1657 = vadd.f32 0.0, %v1656
        %v1658 = vpop.f32.mrb[0].mxu0
        %v1659 = vadd.f32 0.0, %v1658
        %v1660 = vpop.f32.mrb[0].mxu0
        %v1661 = vadd.f32 0.0, %v1660
        %v1662 = vpop.f32.mrb[0].mxu0
        %v1663 = vadd.f32 0.0, %v1662
        %1664 = vdwg.mxu0
        %v1665 = vpack.c.bf16 %v1631, %v1627
        %v1666 = vpack.c.bf16 %v1633, %v1629
        %v1667 = vpack.c.bf16 %v1641, %v1637
        %v1668 = vpack.c.bf16 %v1643, %v1639
        %v1669 = vpack.c.bf16 %v1651, %v1647
        %v1670 = vpack.c.bf16 %v1653, %v1649
        %v1671 = vpack.c.bf16 %v1661, %v1657
        %v1672 = vpack.c.bf16 %v1663, %v1659
        %v1681 = vunpack.c.l.b16 %v1665
        %v1682 = vunpack.c.l.b16 %v1666
        %v1683 = vunpack.c.h.b16 %v1665
        %v1684 = vunpack.c.h.b16 %v1666
        %v1685 = vunpack.c.l.b16 %v1667
        %v1686 = vunpack.c.l.b16 %v1668
        %v1687 = vunpack.c.h.b16 %v1667
        %v1688 = vunpack.c.h.b16 %v1668
        %v1689 = vunpack.c.l.b16 %v1669
        %v1690 = vunpack.c.l.b16 %v1670
        %v1691 = vunpack.c.h.b16 %v1669
        %v1692 = vunpack.c.h.b16 %v1670
        %v1693 = vunpack.c.l.b16 %v1671
        %v1694 = vunpack.c.l.b16 %v1672
        %v1695 = vunpack.c.h.b16 %v1671
        %v1696 = vunpack.c.h.b16 %v1672
        %v1697 = vpack.c.b16 %v1682, %v1681
        %v1698 = vpack.c.b16 %v1684, %v1683
        %v1699 = vpack.c.b16 %v1686, %v1685
        %v1700 = vpack.c.b16 %v1688, %v1687
        %v1701 = vpack.c.b16 %v1690, %v1689
        %v1702 = vpack.c.b16 %v1692, %v1691
        %v1703 = vpack.c.b16 %v1694, %v1693
        %v1704 = vpack.c.b16 %v1696, %v1695
        %s1713 = scalar_lea.vmem %s436, 128 [#allocation3]
        %1714 = vst.msk [vmem:[%s1713] sm:$0xff] %vm736, %v1697
        %1715 = vst.msk [vmem:[%s1713 + $0x8] sm:$0xff] %vm736, %v1698
        %1716 = vst.msk [vmem:[%s1713 + $0x10] sm:$0xff] %vm736, %v1699
        %1717 = vst.msk [vmem:[%s1713 + $0x18] sm:$0xff] %vm736, %v1700
        %1718 = vst.msk [vmem:[%s1713 + $0x20] sm:$0xff] %vm736, %v1701
        %1719 = vst.msk [vmem:[%s1713 + $0x28] sm:$0xff] %vm736, %v1702
        %1720 = vst.msk [vmem:[%s1713 + $0x30] sm:$0xff] %vm736, %v1703
        %1721 = vst.msk [vmem:[%s1713 + $0x38] sm:$0xff] %vm736, %v1704
        %s1722 = scalar_lea.vmem %s2, 288
        %v1723 = vld [vmem:[%s1722] sm:$0xff]
        %v1724 = vld [vmem:[%s1722 + $0x8] sm:$0xff]
        %v1725 = vld [vmem:[%s1722 + $0x10] sm:$0xff]
        %v1726 = vld [vmem:[%s1722 + $0x18] sm:$0xff]
        %v1727 = vld [vmem:[%s1722 + $0x20] sm:$0xff]
        %v1728 = vld [vmem:[%s1722 + $0x28] sm:$0xff]
        %v1729 = vld [vmem:[%s1722 + $0x30] sm:$0xff]
        %v1730 = vld [vmem:[%s1722 + $0x38] sm:$0xff]
        %v1731 = vld [vmem:[%s1722 + $0x40] sm:$0xff]
        %v1732 = vld [vmem:[%s1722 + $0x48] sm:$0xff]
        %v1733 = vld [vmem:[%s1722 + $0x50] sm:$0xff]
        %v1734 = vld [vmem:[%s1722 + $0x58] sm:$0xff]
        %v1735 = vld [vmem:[%s1722 + $0x60] sm:$0xff]
        %v1736 = vld [vmem:[%s1722 + $0x68] sm:$0xff]
        %v1737 = vld [vmem:[%s1722 + $0x70] sm:$0xff]
        %v1738 = vld [vmem:[%s1722 + $0x78] sm:$0xff]
        %v1739 = vld [vmem:[%s1722 + $0x80] sm:$0xff]
        %v1740 = vld [vmem:[%s1722 + $0x88] sm:$0xff]
        %v1759 = vunpack.c.l.b16 %v1723
        %v1760 = vunpack.c.h.b16 %v1723
        %v1761 = vunpack.c.l.b16 %v1724
        %v1762 = vunpack.c.h.b16 %v1724
        %v1763 = vunpack.c.l.b16 %v1725
        %v1764 = vunpack.c.h.b16 %v1725
        %v1765 = vunpack.c.l.b16 %v1726
        %v1766 = vunpack.c.h.b16 %v1726
        %v1767 = vunpack.c.l.b16 %v1727
        %v1768 = vunpack.c.h.b16 %v1727
        %v1769 = vunpack.c.l.b16 %v1728
        %v1770 = vunpack.c.h.b16 %v1728
        %v1771 = vunpack.c.l.b16 %v1729
        %v1772 = vunpack.c.h.b16 %v1729
        %v1773 = vunpack.c.l.b16 %v1730
        %v1774 = vunpack.c.h.b16 %v1730
        %v1775 = vunpack.c.l.b16 %v1731
        %v1776 = vunpack.c.h.b16 %v1731
        %v1777 = vunpack.c.l.b16 %v1732
        %v1778 = vunpack.c.h.b16 %v1732
        %v1779 = vunpack.c.l.b16 %v1733
        %v1780 = vunpack.c.h.b16 %v1733
        %v1781 = vunpack.c.l.b16 %v1734
        %v1782 = vunpack.c.h.b16 %v1734
        %v1783 = vunpack.c.l.b16 %v1735
        %v1784 = vunpack.c.h.b16 %v1735
        %v1785 = vunpack.c.l.b16 %v1736
        %v1786 = vunpack.c.h.b16 %v1736
        %v1787 = vunpack.c.l.b16 %v1737
        %v1788 = vunpack.c.h.b16 %v1737
        %v1789 = vunpack.c.l.b16 %v1738
        %v1790 = vunpack.c.h.b16 %v1738
        %v1791 = vunpack.c.l.b16 %v1739
        %v1792 = vunpack.c.h.b16 %v1739
        %v1793 = vunpack.c.l.b16 %v1740
        %v1794 = vunpack.c.h.b16 %v1740
        %v1795 = vpack.c.b16 %v1761, %v1759
        %v1796 = vpack.c.b16 %v1762, %v1760
        %v1797 = vpack.c.b16 %v1765, %v1763
        %v1798 = vpack.c.b16 %v1766, %v1764
        %v1799 = vpack.c.b16 %v1769, %v1767
        %v1800 = vpack.c.b16 %v1770, %v1768
        %v1801 = vpack.c.b16 %v1773, %v1771
        %v1802 = vpack.c.b16 %v1774, %v1772
        %v1803 = vpack.c.b16 %v1777, %v1775
        %v1804 = vpack.c.b16 %v1778, %v1776
        %v1805 = vpack.c.b16 %v1781, %v1779
        %v1806 = vpack.c.b16 %v1782, %v1780
        %v1807 = vpack.c.b16 %v1785, %v1783
        %v1808 = vpack.c.b16 %v1786, %v1784
        %v1809 = vpack.c.b16 %v1789, %v1787
        %v1810 = vpack.c.b16 %v1790, %v1788
        %v1811 = vpack.c.b16 %v1793, %v1791
        %v1812 = vpack.c.b16 %v1794, %v1792
        %v1832 = vsel %vm600, %v1666, 0
        %v1835 = vsel %vm600, %v1668, 0
        %v1838 = vsel %vm600, %v1670, 0
        %v1841 = vsel %vm600, %v1672, 0
        %1843 = vmatprep.subr.bf16.mxu0 %v1796
        %1844 = vmatpush1.bf16.msra.mxu0 %v1795
        %1845 = vmatprep.subr.bf16.mxu0 %v1798
        %1846 = vmatpush1.bf16.msra.mxu0 %v1797
        %1847 = vmatprep.subr.bf16.mxu0 %v1800
        %1848 = vmatpush1.bf16.msra.mxu0 %v1799
        %1849 = vmatprep.subr.bf16.mxu0 %v1802
        %1850 = vmatpush1.bf16.msra.mxu0 %v1801
        %1851 = vmatprep.subr.bf16.mxu0 %v1804
        %1852 = vmatpush1.bf16.msra.mxu0 %v1803
        %1853 = vmatprep.subr.bf16.mxu0 %v1806
        %1854 = vmatpush1.bf16.msra.mxu0 %v1805
        %1855 = vmatprep.subr.bf16.mxu0 %v1808
        %1856 = vmatpush1.bf16.msra.mxu0 %v1807
        %1857 = vmatprep.subr.bf16.mxu0 %v1810
        %1858 = vmatpush1.bf16.msra.mxu0 %v1809
        %1859 = vmatprep.subr.bf16.mxu0 %v1812
        %1860 = vmatpush1.bf16.msra.mxu0 %v1811
        %1861 = vmatprep.subr.bf16.mxu0 0
        %1862 = vmatpush1.bf16.msra.mxu0 0
        %1863 = vmatprep.subr.bf16.mxu0 0
        %1864 = vmatpush1.bf16.msra.mxu0 0
        %1865 = vmatprep.subr.bf16.mxu0 0
        %1866 = vmatpush1.bf16.msra.mxu0 0
        %1867 = vmatprep.subr.bf16.mxu0 0
        %1868 = vmatpush1.bf16.msra.mxu0 0
        %1869 = vmatprep.subr.bf16.mxu0 0
        %1870 = vmatpush1.bf16.msra.mxu0 0
        %1871 = vmatprep.subr.bf16.mxu0 0
        %1872 = vmatpush1.bf16.msra.mxu0 0
        %1873 = vmatprep.subr.bf16.mxu0 0
        %1874 = vmatpush1.bf16.msra.mxu0 0
        %1875 = vmatprep.mubr.bf16.mxu0 %v1832
        %1876 = vmatmul.mubr.bf16.gmra.mrb[0].mxu0 %v1665
        %v1877 = vpop.f32.mrb[0].mxu0
        %v1878 = vadd.f32 0.0, %v1877
        %v1879 = vpop.f32.mrb[0].mxu0
        %v1880 = vadd.f32 0.0, %v1879
        %v1881 = vpop.f32.mrb[0].mxu0
        %v1882 = vadd.f32 0.0, %v1881
        %v1883 = vpop.f32.mrb[0].mxu0
        %v1884 = vadd.f32 0.0, %v1883
        %1885 = vmatprep.mubr.bf16.mxu0 %v1835
        %1886 = vmatmul.mubr.bf16.gmra.mrb[0].mxu0 %v1667
        %v1887 = vpop.f32.mrb[0].mxu0
        %v1888 = vadd.f32 0.0, %v1887
        %v1889 = vpop.f32.mrb[0].mxu0
        %v1890 = vadd.f32 0.0, %v1889
        %v1891 = vpop.f32.mrb[0].mxu0
        %v1892 = vadd.f32 0.0, %v1891
        %v1893 = vpop.f32.mrb[0].mxu0
        %v1894 = vadd.f32 0.0, %v1893
        %1895 = vmatprep.mubr.bf16.mxu0 %v1838
        %1896 = vmatmul.mubr.bf16.gmra.mrb[0].mxu0 %v1669
        %v1897 = vpop.f32.mrb[0].mxu0
        %v1898 = vadd.f32 0.0, %v1897
        %v1899 = vpop.f32.mrb[0].mxu0
        %v1900 = vadd.f32 0.0, %v1899
        %v1901 = vpop.f32.mrb[0].mxu0
        %v1902 = vadd.f32 0.0, %v1901
        %v1903 = vpop.f32.mrb[0].mxu0
        %v1904 = vadd.f32 0.0, %v1903
        %1905 = vmatprep.mubr.bf16.mxu0 %v1841
        %1906 = vmatmul.mubr.bf16.gmra.mrb[0].mxu0 %v1671
        %v1907 = vpop.f32.mrb[0].mxu0
        %v1908 = vadd.f32 0.0, %v1907
        %v1909 = vpop.f32.mrb[0].mxu0
        %v1910 = vadd.f32 0.0, %v1909
        %v1911 = vpop.f32.mrb[0].mxu0
        %v1912 = vadd.f32 0.0, %v1911
        %v1913 = vpop.f32.mrb[0].mxu0
        %v1914 = vadd.f32 0.0, %v1913
        %1915 = vdwg.mxu0
        %v1916 = vadd.f32 %v1389, %v1878
        %v1917 = vadd.f32 %v1391, %v1880
        %v1918 = vadd.f32 %v1393, %v1882
        %v1919 = vadd.f32 %v1395, %v1884
        %v1920 = vadd.f32 %v1399, %v1888
        %v1921 = vadd.f32 %v1401, %v1890
        %v1922 = vadd.f32 %v1403, %v1892
        %v1923 = vadd.f32 %v1405, %v1894
        %v1924 = vadd.f32 %v1409, %v1898
        %v1925 = vadd.f32 %v1411, %v1900
        %v1926 = vadd.f32 %v1413, %v1902
        %v1927 = vadd.f32 %v1415, %v1904
        %v1928 = vadd.f32 %v1419, %v1908
        %v1929 = vadd.f32 %v1421, %v1910
        %v1930 = vadd.f32 %v1423, %v1912
        %v1931 = vadd.f32 %v1425, %v1914
        %s1932 = scalar_lea.vmem %s411, 192 [#allocation2]
        %v1933 = vld [vmem:[%s1932] sm:$0xff]
        %v1934 = vld [vmem:[%s1932 + $0x8] sm:$0xff]
        %v1935 = vld [vmem:[%s1932 + $0x10] sm:$0xff]
        %v1936 = vld [vmem:[%s1932 + $0x18] sm:$0xff]
        %v1937 = vld [vmem:[%s1932 + $0x20] sm:$0xff]
        %v1938 = vld [vmem:[%s1932 + $0x28] sm:$0xff]
        %v1939 = vld [vmem:[%s1932 + $0x30] sm:$0xff]
        %v1940 = vld [vmem:[%s1932 + $0x38] sm:$0xff]
        %v1941 = vld [vmem:[%s1] sm:$0xff]
        %v1942 = vld [vmem:[%s1 + $0x8] sm:$0xff]
        %v1943 = vld [vmem:[%s1 + $0x10] sm:$0xff]
        %v1944 = vld [vmem:[%s1 + $0x18] sm:$0xff]
        %v1945 = vld [vmem:[%s1 + $0x20] sm:$0xff]
        %v1946 = vld [vmem:[%s1 + $0x28] sm:$0xff]
        %v1947 = vld [vmem:[%s1 + $0x30] sm:$0xff]
        %v1948 = vld [vmem:[%s1 + $0x38] sm:$0xff]
        %v1949 = vld [vmem:[%s1 + $0x40] sm:$0xff]
        %v1950 = vld [vmem:[%s1 + $0x48] sm:$0xff]
        %v1951 = vld [vmem:[%s1 + $0x50] sm:$0xff]
        %v1952 = vld [vmem:[%s1 + $0x58] sm:$0xff]
        %v1953 = vld [vmem:[%s1 + $0x60] sm:$0xff]
        %v1954 = vld [vmem:[%s1 + $0x68] sm:$0xff]
        %v1955 = vld [vmem:[%s1 + $0x70] sm:$0xff]
        %v1956 = vld [vmem:[%s1 + $0x78] sm:$0xff]
        %v1957 = vld [vmem:[%s1 + $0x80] sm:$0xff]
        %v1958 = vld [vmem:[%s1 + $0x88] sm:$0xff]
        %v1967 = vunpack.c.l.b16 %v1933
        %v1968 = vunpack.c.h.b16 %v1933
        %v1969 = vunpack.c.l.b16 %v1934
        %v1970 = vunpack.c.h.b16 %v1934
        %v1971 = vunpack.c.l.b16 %v1935
        %v1972 = vunpack.c.h.b16 %v1935
        %v1973 = vunpack.c.l.b16 %v1936
        %v1974 = vunpack.c.h.b16 %v1936
        %v1975 = vunpack.c.l.b16 %v1937
        %v1976 = vunpack.c.h.b16 %v1937
        %v1977 = vunpack.c.l.b16 %v1938
        %v1978 = vunpack.c.h.b16 %v1938
        %v1979 = vunpack.c.l.b16 %v1939
        %v1980 = vunpack.c.h.b16 %v1939
        %v1981 = vunpack.c.l.b16 %v1940
        %v1982 = vunpack.c.h.b16 %v1940
        %v1983 = vpack.c.b16 %v1969, %v1967
        %v1984 = vpack.c.b16 %v1970, %v1968
        %v1985 = vpack.c.b16 %v1973, %v1971
        %v1986 = vpack.c.b16 %v1974, %v1972
        %v1987 = vpack.c.b16 %v1977, %v1975
        %v1988 = vpack.c.b16 %v1978, %v1976
        %v1989 = vpack.c.b16 %v1981, %v1979
        %v1990 = vpack.c.b16 %v1982, %v1980
        %v2013 = vunpack.c.l.b16 %v1941
        %v2014 = vunpack.c.h.b16 %v1941
        %v2015 = vunpack.c.l.b16 %v1942
        %v2016 = vunpack.c.h.b16 %v1942
        %v2017 = vunpack.c.l.b16 %v1943
        %v2018 = vunpack.c.h.b16 %v1943
        %v2019 = vunpack.c.l.b16 %v1944
        %v2020 = vunpack.c.h.b16 %v1944
        %v2021 = vunpack.c.l.b16 %v1945
        %v2022 = vunpack.c.h.b16 %v1945
        %v2023 = vunpack.c.l.b16 %v1946
        %v2024 = vunpack.c.h.b16 %v1946
        %v2025 = vunpack.c.l.b16 %v1947
        %v2026 = vunpack.c.h.b16 %v1947
        %v2027 = vunpack.c.l.b16 %v1948
        %v2028 = vunpack.c.h.b16 %v1948
        %v2029 = vunpack.c.l.b16 %v1949
        %v2030 = vunpack.c.h.b16 %v1949
        %v2031 = vunpack.c.l.b16 %v1950
        %v2032 = vunpack.c.h.b16 %v1950
        %v2033 = vunpack.c.l.b16 %v1951
        %v2034 = vunpack.c.h.b16 %v1951
        %v2035 = vunpack.c.l.b16 %v1952
        %v2036 = vunpack.c.h.b16 %v1952
        %v2037 = vunpack.c.l.b16 %v1953
        %v2038 = vunpack.c.h.b16 %v1953
        %v2039 = vunpack.c.l.b16 %v1954
        %v2040 = vunpack.c.h.b16 %v1954
        %v2041 = vunpack.c.l.b16 %v1955
        %v2042 = vunpack.c.h.b16 %v1955
        %v2043 = vunpack.c.l.b16 %v1956
        %v2044 = vunpack.c.h.b16 %v1956
        %v2045 = vunpack.c.l.b16 %v1957
        %v2046 = vunpack.c.h.b16 %v1957
        %v2047 = vunpack.c.l.b16 %v1958
        %v2048 = vunpack.c.h.b16 %v1958
        %v2049 = vpack.c.b16 %v2015, %v2013
        %v2050 = vpack.c.b16 %v2016, %v2014
        %v2051 = vpack.c.b16 %v2019, %v2017
        %v2052 = vpack.c.b16 %v2020, %v2018
        %v2053 = vpack.c.b16 %v2023, %v2021
        %v2054 = vpack.c.b16 %v2024, %v2022
        %v2055 = vpack.c.b16 %v2027, %v2025
        %v2056 = vpack.c.b16 %v2028, %v2026
        %v2057 = vpack.c.b16 %v2031, %v2029
        %v2058 = vpack.c.b16 %v2032, %v2030
        %v2059 = vpack.c.b16 %v2035, %v2033
        %v2060 = vpack.c.b16 %v2036, %v2034
        %v2061 = vpack.c.b16 %v2039, %v2037
        %v2062 = vpack.c.b16 %v2040, %v2038
        %v2063 = vpack.c.b16 %v2043, %v2041
        %v2064 = vpack.c.b16 %v2044, %v2042
        %v2065 = vpack.c.b16 %v2047, %v2045
        %v2066 = vpack.c.b16 %v2048, %v2046
        %v2086 = vsel %vm600, %v1984, 0
        %v2089 = vsel %vm600, %v1986, 0
        %v2092 = vsel %vm600, %v1988, 0
        %v2095 = vsel %vm600, %v1990, 0
        %2097 = vmatprep.subr.bf16.mxu0 %v2050
        %2098 = vmatpush1.bf16.msra.mxu0 %v2049
        %2099 = vmatprep.subr.bf16.mxu0 %v2052
        %2100 = vmatpush1.bf16.msra.mxu0 %v2051
        %2101 = vmatprep.subr.bf16.mxu0 %v2054
        %2102 = vmatpush1.bf16.msra.mxu0 %v2053
        %2103 = vmatprep.subr.bf16.mxu0 %v2056
        %2104 = vmatpush1.bf16.msra.mxu0 %v2055
        %2105 = vmatprep.subr.bf16.mxu0 %v2058
        %2106 = vmatpush1.bf16.msra.mxu0 %v2057
        %2107 = vmatprep.subr.bf16.mxu0 %v2060
        %2108 = vmatpush1.bf16.msra.mxu0 %v2059
        %2109 = vmatprep.subr.bf16.mxu0 %v2062
        %2110 = vmatpush1.bf16.msra.mxu0 %v2061
        %2111 = vmatprep.subr.bf16.mxu0 %v2064
        %2112 = vmatpush1.bf16.msra.mxu0 %v2063
        %2113 = vmatprep.subr.bf16.mxu0 %v2066
        %2114 = vmatpush1.bf16.msra.mxu0 %v2065
        %2115 = vmatprep.subr.bf16.mxu0 0
        %2116 = vmatpush1.bf16.msra.mxu0 0
        %2117 = vmatprep.subr.bf16.mxu0 0
        %2118 = vmatpush1.bf16.msra.mxu0 0
        %2119 = vmatprep.subr.bf16.mxu0 0
        %2120 = vmatpush1.bf16.msra.mxu0 0
        %2121 = vmatprep.subr.bf16.mxu0 0
        %2122 = vmatpush1.bf16.msra.mxu0 0
        %2123 = vmatprep.subr.bf16.mxu0 0
        %2124 = vmatpush1.bf16.msra.mxu0 0
        %2125 = vmatprep.subr.bf16.mxu0 0
        %2126 = vmatpush1.bf16.msra.mxu0 0
        %2127 = vmatprep.subr.bf16.mxu0 0
        %2128 = vmatpush1.bf16.msra.mxu0 0
        %2129 = vmatprep.mubr.bf16.mxu0 %v2086
        %2130 = vmatmul.mubr.bf16.gmra.mrb[0].mxu0 %v1983
        %v2131 = vpop.f32.mrb[0].mxu0
        %v2132 = vadd.f32 0.0, %v2131
        %v2133 = vpop.f32.mrb[0].mxu0
        %v2134 = vadd.f32 0.0, %v2133
        %v2135 = vpop.f32.mrb[0].mxu0
        %v2136 = vadd.f32 0.0, %v2135
        %v2137 = vpop.f32.mrb[0].mxu0
        %v2138 = vadd.f32 0.0, %v2137
        %2139 = vmatprep.mubr.bf16.mxu0 %v2089
        %2140 = vmatmul.mubr.bf16.gmra.mrb[0].mxu0 %v1985
        %v2141 = vpop.f32.mrb[0].mxu0
        %v2142 = vadd.f32 0.0, %v2141
        %v2143 = vpop.f32.mrb[0].mxu0
        %v2144 = vadd.f32 0.0, %v2143
        %v2145 = vpop.f32.mrb[0].mxu0
        %v2146 = vadd.f32 0.0, %v2145
        %v2147 = vpop.f32.mrb[0].mxu0
        %v2148 = vadd.f32 0.0, %v2147
        %2149 = vmatprep.mubr.bf16.mxu0 %v2092
        %2150 = vmatmul.mubr.bf16.gmra.mrb[0].mxu0 %v1987
        %v2151 = vpop.f32.mrb[0].mxu0
        %v2152 = vadd.f32 0.0, %v2151
        %v2153 = vpop.f32.mrb[0].mxu0
        %v2154 = vadd.f32 0.0, %v2153
        %v2155 = vpop.f32.mrb[0].mxu0
        %v2156 = vadd.f32 0.0, %v2155
        %v2157 = vpop.f32.mrb[0].mxu0
        %v2158 = vadd.f32 0.0, %v2157
        %2159 = vmatprep.mubr.bf16.mxu0 %v2095
        %2160 = vmatmul.mubr.bf16.gmra.mrb[0].mxu0 %v1989
        %v2161 = vpop.f32.mrb[0].mxu0
        %v2162 = vadd.f32 0.0, %v2161
        %v2163 = vpop.f32.mrb[0].mxu0
        %v2164 = vadd.f32 0.0, %v2163
        %v2165 = vpop.f32.mrb[0].mxu0
        %v2166 = vadd.f32 0.0, %v2165
        %v2167 = vpop.f32.mrb[0].mxu0
        %v2168 = vadd.f32 0.0, %v2167
        %2169 = vdwg.mxu0
        %v2170 = vpack.c.bf16 %v2136, %v2132
        %v2171 = vpack.c.bf16 %v2138, %v2134
        %v2172 = vpack.c.bf16 %v2146, %v2142
        %v2173 = vpack.c.bf16 %v2148, %v2144
        %v2174 = vpack.c.bf16 %v2156, %v2152
        %v2175 = vpack.c.bf16 %v2158, %v2154
        %v2176 = vpack.c.bf16 %v2166, %v2162
        %v2177 = vpack.c.bf16 %v2168, %v2164
        %v2186 = vunpack.c.l.b16 %v2170
        %v2187 = vunpack.c.l.b16 %v2171
        %v2188 = vunpack.c.h.b16 %v2170
        %v2189 = vunpack.c.h.b16 %v2171
        %v2190 = vunpack.c.l.b16 %v2172
        %v2191 = vunpack.c.l.b16 %v2173
        %v2192 = vunpack.c.h.b16 %v2172
        %v2193 = vunpack.c.h.b16 %v2173
        %v2194 = vunpack.c.l.b16 %v2174
        %v2195 = vunpack.c.l.b16 %v2175
        %v2196 = vunpack.c.h.b16 %v2174
        %v2197 = vunpack.c.h.b16 %v2175
        %v2198 = vunpack.c.l.b16 %v2176
        %v2199 = vunpack.c.l.b16 %v2177
        %v2200 = vunpack.c.h.b16 %v2176
        %v2201 = vunpack.c.h.b16 %v2177
        %v2202 = vpack.c.b16 %v2187, %v2186
        %v2203 = vpack.c.b16 %v2189, %v2188
        %v2204 = vpack.c.b16 %v2191, %v2190
        %v2205 = vpack.c.b16 %v2193, %v2192
        %v2206 = vpack.c.b16 %v2195, %v2194
        %v2207 = vpack.c.b16 %v2197, %v2196
        %v2208 = vpack.c.b16 %v2199, %v2198
        %v2209 = vpack.c.b16 %v2201, %v2200
        %s2218 = scalar_lea.vmem %s436, 192 [#allocation3]
        %2219 = vst.msk [vmem:[%s2218] sm:$0xff] %vm736, %v2202
        %2220 = vst.msk [vmem:[%s2218 + $0x8] sm:$0xff] %vm736, %v2203
        %2221 = vst.msk [vmem:[%s2218 + $0x10] sm:$0xff] %vm736, %v2204
        %2222 = vst.msk [vmem:[%s2218 + $0x18] sm:$0xff] %vm736, %v2205
        %2223 = vst.msk [vmem:[%s2218 + $0x20] sm:$0xff] %vm736, %v2206
        %2224 = vst.msk [vmem:[%s2218 + $0x28] sm:$0xff] %vm736, %v2207
        %2225 = vst.msk [vmem:[%s2218 + $0x30] sm:$0xff] %vm736, %v2208
        %2226 = vst.msk [vmem:[%s2218 + $0x38] sm:$0xff] %vm736, %v2209
        %s2227 = scalar_lea.vmem %s2, 432
        %v2228 = vld [vmem:[%s2227] sm:$0xff]
        %v2229 = vld [vmem:[%s2227 + $0x8] sm:$0xff]
        %v2230 = vld [vmem:[%s2227 + $0x10] sm:$0xff]
        %v2231 = vld [vmem:[%s2227 + $0x18] sm:$0xff]
        %v2232 = vld [vmem:[%s2227 + $0x20] sm:$0xff]
        %v2233 = vld [vmem:[%s2227 + $0x28] sm:$0xff]
        %v2234 = vld [vmem:[%s2227 + $0x30] sm:$0xff]
        %v2235 = vld [vmem:[%s2227 + $0x38] sm:$0xff]
        %v2236 = vld [vmem:[%s2227 + $0x40] sm:$0xff]
        %v2237 = vld [vmem:[%s2227 + $0x48] sm:$0xff]
        %v2238 = vld [vmem:[%s2227 + $0x50] sm:$0xff]
        %v2239 = vld [vmem:[%s2227 + $0x58] sm:$0xff]
        %v2240 = vld [vmem:[%s2227 + $0x60] sm:$0xff]
        %v2241 = vld [vmem:[%s2227 + $0x68] sm:$0xff]
        %v2242 = vld [vmem:[%s2227 + $0x70] sm:$0xff]
        %v2243 = vld [vmem:[%s2227 + $0x78] sm:$0xff]
        %v2244 = vld [vmem:[%s2227 + $0x80] sm:$0xff]
        %v2245 = vld [vmem:[%s2227 + $0x88] sm:$0xff]
        %v2264 = vunpack.c.l.b16 %v2228
        %v2265 = vunpack.c.h.b16 %v2228
        %v2266 = vunpack.c.l.b16 %v2229
        %v2267 = vunpack.c.h.b16 %v2229
        %v2268 = vunpack.c.l.b16 %v2230
        %v2269 = vunpack.c.h.b16 %v2230
        %v2270 = vunpack.c.l.b16 %v2231
        %v2271 = vunpack.c.h.b16 %v2231
        %v2272 = vunpack.c.l.b16 %v2232
        %v2273 = vunpack.c.h.b16 %v2232
        %v2274 = vunpack.c.l.b16 %v2233
        %v2275 = vunpack.c.h.b16 %v2233
        %v2276 = vunpack.c.l.b16 %v2234
        %v2277 = vunpack.c.h.b16 %v2234
        %v2278 = vunpack.c.l.b16 %v2235
        %v2279 = vunpack.c.h.b16 %v2235
        %v2280 = vunpack.c.l.b16 %v2236
        %v2281 = vunpack.c.h.b16 %v2236
        %v2282 = vunpack.c.l.b16 %v2237
        %v2283 = vunpack.c.h.b16 %v2237
        %v2284 = vunpack.c.l.b16 %v2238
        %v2285 = vunpack.c.h.b16 %v2238
        %v2286 = vunpack.c.l.b16 %v2239
        %v2287 = vunpack.c.h.b16 %v2239
        %v2288 = vunpack.c.l.b16 %v2240
        %v2289 = vunpack.c.h.b16 %v2240
        %v2290 = vunpack.c.l.b16 %v2241
        %v2291 = vunpack.c.h.b16 %v2241
        %v2292 = vunpack.c.l.b16 %v2242
        %v2293 = vunpack.c.h.b16 %v2242
        %v2294 = vunpack.c.l.b16 %v2243
        %v2295 = vunpack.c.h.b16 %v2243
        %v2296 = vunpack.c.l.b16 %v2244
        %v2297 = vunpack.c.h.b16 %v2244
        %v2298 = vunpack.c.l.b16 %v2245
        %v2299 = vunpack.c.h.b16 %v2245
        %v2300 = vpack.c.b16 %v2266, %v2264
        %v2301 = vpack.c.b16 %v2267, %v2265
        %v2302 = vpack.c.b16 %v2270, %v2268
        %v2303 = vpack.c.b16 %v2271, %v2269
        %v2304 = vpack.c.b16 %v2274, %v2272
        %v2305 = vpack.c.b16 %v2275, %v2273
        %v2306 = vpack.c.b16 %v2278, %v2276
        %v2307 = vpack.c.b16 %v2279, %v2277
        %v2308 = vpack.c.b16 %v2282, %v2280
        %v2309 = vpack.c.b16 %v2283, %v2281
        %v2310 = vpack.c.b16 %v2286, %v2284
        %v2311 = vpack.c.b16 %v2287, %v2285
        %v2312 = vpack.c.b16 %v2290, %v2288
        %v2313 = vpack.c.b16 %v2291, %v2289
        %v2314 = vpack.c.b16 %v2294, %v2292
        %v2315 = vpack.c.b16 %v2295, %v2293
        %v2316 = vpack.c.b16 %v2298, %v2296
        %v2317 = vpack.c.b16 %v2299, %v2297
        %v2337 = vsel %vm600, %v2171, 0
        %v2340 = vsel %vm600, %v2173, 0
        %v2343 = vsel %vm600, %v2175, 0
        %v2346 = vsel %vm600, %v2177, 0
        %2348 = vmatprep.subr.bf16.mxu0 %v2301
        %2349 = vmatpush1.bf16.msra.mxu0 %v2300
        %2350 = vmatprep.subr.bf16.mxu0 %v2303
        %2351 = vmatpush1.bf16.msra.mxu0 %v2302
        %2352 = vmatprep.subr.bf16.mxu0 %v2305
        %2353 = vmatpush1.bf16.msra.mxu0 %v2304
        %2354 = vmatprep.subr.bf16.mxu0 %v2307
        %2355 = vmatpush1.bf16.msra.mxu0 %v2306
        %2356 = vmatprep.subr.bf16.mxu0 %v2309
        %2357 = vmatpush1.bf16.msra.mxu0 %v2308
        %2358 = vmatprep.subr.bf16.mxu0 %v2311
        %2359 = vmatpush1.bf16.msra.mxu0 %v2310
        %2360 = vmatprep.subr.bf16.mxu0 %v2313
        %2361 = vmatpush1.bf16.msra.mxu0 %v2312
        %2362 = vmatprep.subr.bf16.mxu0 %v2315
        %2363 = vmatpush1.bf16.msra.mxu0 %v2314
        %2364 = vmatprep.subr.bf16.mxu0 %v2317
        %2365 = vmatpush1.bf16.msra.mxu0 %v2316
        %2366 = vmatprep.subr.bf16.mxu0 0
        %2367 = vmatpush1.bf16.msra.mxu0 0
        %2368 = vmatprep.subr.bf16.mxu0 0
        %2369 = vmatpush1.bf16.msra.mxu0 0
        %2370 = vmatprep.subr.bf16.mxu0 0
        %2371 = vmatpush1.bf16.msra.mxu0 0
        %2372 = vmatprep.subr.bf16.mxu0 0
        %2373 = vmatpush1.bf16.msra.mxu0 0
        %2374 = vmatprep.subr.bf16.mxu0 0
        %2375 = vmatpush1.bf16.msra.mxu0 0
        %2376 = vmatprep.subr.bf16.mxu0 0
        %2377 = vmatpush1.bf16.msra.mxu0 0
        %2378 = vmatprep.subr.bf16.mxu0 0
        %2379 = vmatpush1.bf16.msra.mxu0 0
        %2380 = vmatprep.mubr.bf16.mxu0 %v2337
        %2381 = vmatmul.mubr.bf16.gmra.mrb[0].mxu0 %v2170
        %v2382 = vpop.f32.mrb[0].mxu0
        %v2383 = vadd.f32 0.0, %v2382
        %v2384 = vpop.f32.mrb[0].mxu0
        %v2385 = vadd.f32 0.0, %v2384
        %v2386 = vpop.f32.mrb[0].mxu0
        %v2387 = vadd.f32 0.0, %v2386
        %v2388 = vpop.f32.mrb[0].mxu0
        %v2389 = vadd.f32 0.0, %v2388
        %2390 = vmatprep.mubr.bf16.mxu0 %v2340
        %2391 = vmatmul.mubr.bf16.gmra.mrb[0].mxu0 %v2172
        %v2392 = vpop.f32.mrb[0].mxu0
        %v2393 = vadd.f32 0.0, %v2392
        %v2394 = vpop.f32.mrb[0].mxu0
        %v2395 = vadd.f32 0.0, %v2394
        %v2396 = vpop.f32.mrb[0].mxu0
        %v2397 = vadd.f32 0.0, %v2396
        %v2398 = vpop.f32.mrb[0].mxu0
        %v2399 = vadd.f32 0.0, %v2398
        %2400 = vmatprep.mubr.bf16.mxu0 %v2343
        %2401 = vmatmul.mubr.bf16.gmra.mrb[0].mxu0 %v2174
        %v2402 = vpop.f32.mrb[0].mxu0
        %v2403 = vadd.f32 0.0, %v2402
        %v2404 = vpop.f32.mrb[0].mxu0
        %v2405 = vadd.f32 0.0, %v2404
        %v2406 = vpop.f32.mrb[0].mxu0
        %v2407 = vadd.f32 0.0, %v2406
        %v2408 = vpop.f32.mrb[0].mxu0
        %v2409 = vadd.f32 0.0, %v2408
        %2410 = vmatprep.mubr.bf16.mxu0 %v2346
        %2411 = vmatmul.mubr.bf16.gmra.mrb[0].mxu0 %v2176
        %v2412 = vpop.f32.mrb[0].mxu0
        %v2413 = vadd.f32 0.0, %v2412
        %v2414 = vpop.f32.mrb[0].mxu0
        %v2415 = vadd.f32 0.0, %v2414
        %v2416 = vpop.f32.mrb[0].mxu0
        %v2417 = vadd.f32 0.0, %v2416
        %v2418 = vpop.f32.mrb[0].mxu0
        %v2419 = vadd.f32 0.0, %v2418
        %2420 = vdwg.mxu0
        %v2421 = vadd.f32 %v1916, %v2383
        %v2422 = vadd.f32 %v1917, %v2385
        %v2423 = vadd.f32 %v1918, %v2387
        %v2424 = vadd.f32 %v1919, %v2389
        %v2425 = vadd.f32 %v1920, %v2393
        %v2426 = vadd.f32 %v1921, %v2395
        %v2427 = vadd.f32 %v1922, %v2397
        %v2428 = vadd.f32 %v1923, %v2399
        %v2429 = vadd.f32 %v1924, %v2403
        %v2430 = vadd.f32 %v1925, %v2405
        %v2431 = vadd.f32 %v1926, %v2407
        %v2432 = vadd.f32 %v1927, %v2409
        %v2433 = vadd.f32 %v1928, %v2413
        %v2434 = vadd.f32 %v1929, %v2415
        %v2435 = vadd.f32 %v1930, %v2417
        %v2436 = vadd.f32 %v1931, %v2419
        %v2437 = vld [vmem:[%s4] sm:$0x3]
        %v2438 = vld [vmem:[%s5] sm:$0x3]
        %v2439 = vlaneseq
        %v2440 = vshrl.u32 %v2439, 7
        %v2441 = vsub.s32 0, %v2440
        %v2442 = vrot.slane %v2437, %v2441
        %v2443 = vmul.f32 %v2422, %v2442
        %v2444 = vmul.f32 %v2424, %v2442
        %v2445 = vmul.f32 %v2426, %v2442
        %v2446 = vmul.f32 %v2428, %v2442
        %v2447 = vmul.f32 %v2430, %v2442
        %v2448 = vmul.f32 %v2432, %v2442
        %v2449 = vmul.f32 %v2434, %v2442
        %v2450 = vmul.f32 %v2436, %v2442
        %v2451 = vlaneseq
        %v2452 = vshrl.u32 %v2451, 7
        %v2453 = vsub.s32 1, %v2452
        %v2454 = vrot.slane %v2437, %v2453
        %v2455 = vadd.f32 %v2443, %v2454
        %v2456 = vadd.f32 %v2444, %v2454
        %v2457 = vadd.f32 %v2445, %v2454
        %v2458 = vadd.f32 %v2446, %v2454
        %v2459 = vadd.f32 %v2447, %v2454
        %v2460 = vadd.f32 %v2448, %v2454
        %v2461 = vadd.f32 %v2449, %v2454
        %v2462 = vadd.f32 %v2450, %v2454
        %v2463 = vxor.u32 %v2455, 2147483648
        %v2464 = vxor.u32 %v2456, 2147483648
        %v2465 = vxor.u32 %v2457, 2147483648
        %v2466 = vxor.u32 %v2458, 2147483648
        %v2467 = vxor.u32 %v2459, 2147483648
        %v2468 = vxor.u32 %v2460, 2147483648
        %v2469 = vxor.u32 %v2461, 2147483648
        %v2470 = vxor.u32 %v2462, 2147483648
        %v2471 = vmul.f32 %v2463, 1.442695
        %v2472 = vpow.pop %v2471
        %v2473 = vmul.f32 %v2464, 1.442695
        %v2474 = vpow.pop %v2473
        %v2475 = vmul.f32 %v2465, 1.442695
        %v2476 = vpow.pop %v2475
        %v2477 = vmul.f32 %v2466, 1.442695
        %v2478 = vpow.pop %v2477
        %v2479 = vmul.f32 %v2467, 1.442695
        %v2480 = vpow.pop %v2479
        %v2481 = vmul.f32 %v2468, 1.442695
        %v2482 = vpow.pop %v2481
        %v2483 = vmul.f32 %v2469, 1.442695
        %v2484 = vpow.pop %v2483
        %v2485 = vmul.f32 %v2470, 1.442695
        %v2486 = vpow.pop %v2485
        %v2487 = vadd.f32 %v2472, 1.0
        %v2488 = vadd.f32 %v2474, 1.0
        %v2489 = vadd.f32 %v2476, 1.0
        %v2490 = vadd.f32 %v2478, 1.0
        %v2491 = vadd.f32 %v2480, 1.0
        %v2492 = vadd.f32 %v2482, 1.0
        %v2493 = vadd.f32 %v2484, 1.0
        %v2494 = vadd.f32 %v2486, 1.0
        %v2495 = vrcp.pop %v2487
        %v2496 = vmul.f32 1.0, %v2495
        %v2497 = vrcp.pop %v2488
        %v2498 = vmul.f32 1.0, %v2497
        %v2499 = vrcp.pop %v2489
        %v2500 = vmul.f32 1.0, %v2499
        %v2501 = vrcp.pop %v2490
        %v2502 = vmul.f32 1.0, %v2501
        %v2503 = vrcp.pop %v2491
        %v2504 = vmul.f32 1.0, %v2503
        %v2505 = vrcp.pop %v2492
        %v2506 = vmul.f32 1.0, %v2505
        %v2507 = vrcp.pop %v2493
        %v2508 = vmul.f32 1.0, %v2507
        %v2509 = vrcp.pop %v2494
        %v2510 = vmul.f32 1.0, %v2509
        %v2511 = vpack.c.bf16 %v2498, %v2496
        %v2512 = vpack.c.bf16 %v2502, %v2500
        %v2513 = vpack.c.bf16 %v2506, %v2504
        %v2514 = vpack.c.bf16 %v2510, %v2508
        %v2515 = vld [vmem:[%s3] sm:$0xf]
        %v2516 = vld [vmem:[%s3 + $0x4] sm:$0xf]
        %v2517 = vld [vmem:[%s3 + $0x8] sm:$0xf]
        %v2518 = vld [vmem:[%s3 + $0xc] sm:$0xf]
        %v2519 = vld [vmem:[%s3 + $0x10] sm:$0x3]
        %v2525 = vunpack.c.l.b16 %v2515
        %v2526 = vunpack.c.l.b16 %v2516
        %v2527 = vunpack.c.l.b16 %v2517
        %v2528 = vunpack.c.l.b16 %v2518
        %v2529 = vunpack.c.l.b16 %v2519
        %v2530 = vpack.c.b16 %v2526, %v2525
        %v2531 = vpack.c.b16 %v2528, %v2527
        %v2532 = vpack.c.b16 %v2529, %v2529
        %vm2535 = vcmask 293888
        %v2537 = vsel %vm2535, %v2511, 0
        %v2540 = vsel %vm2535, %v2512, 0
        %v2543 = vsel %vm2535, %v2513, 0
        %v2546 = vsel %vm2535, %v2514, 0
        %vm2548 = vcmask 1041408
        %v2550 = vsel %vm2548, %v2532, 0
        %2552 = vmatprep.subr.bf16.mxu0 0
        %2553 = vmatpush1.bf16.msra.mxu0 %v2530
        %2554 = vmatprep.subr.bf16.mxu0 0
        %2555 = vmatpush1.bf16.msra.mxu0 %v2531
        %2556 = vmatprep.subr.bf16.mxu0 0
        %2557 = vmatpush1.bf16.msra.mxu0 %v2550
        %2558 = vmatprep.subr.bf16.mxu0 0
        %2559 = vmatpush1.bf16.msra.mxu0 0
        %2560 = vmatprep.subr.bf16.mxu0 0
        %2561 = vmatpush1.bf16.msra.mxu0 0
        %2562 = vmatprep.subr.bf16.mxu0 0
        %2563 = vmatpush1.bf16.msra.mxu0 0
        %2564 = vmatprep.subr.bf16.mxu0 0
        %2565 = vmatpush1.bf16.msra.mxu0 0
        %2566 = vmatprep.subr.bf16.mxu0 0
        %2567 = vmatpush1.bf16.msra.mxu0 0
        %2568 = vmatprep.subr.bf16.mxu0 0
        %2569 = vmatpush1.bf16.msra.mxu0 0
        %2570 = vmatprep.subr.bf16.mxu0 0
        %2571 = vmatpush1.bf16.msra.mxu0 0
        %2572 = vmatprep.subr.bf16.mxu0 0
        %2573 = vmatpush1.bf16.msra.mxu0 0
        %2574 = vmatprep.subr.bf16.mxu0 0
        %2575 = vmatpush1.bf16.msra.mxu0 0
        %2576 = vmatprep.subr.bf16.mxu0 0
        %2577 = vmatpush1.bf16.msra.mxu0 0
        %2578 = vmatprep.subr.bf16.mxu0 0
        %2579 = vmatpush1.bf16.msra.mxu0 0
        %2580 = vmatprep.subr.bf16.mxu0 0
        %2581 = vmatpush1.bf16.msra.mxu0 0
        %2582 = vmatprep.subr.bf16.mxu0 0
        %2583 = vmatpush1.bf16.msra.mxu0 0
        %2584 = vmatprep.mubr.bf16.mxu0 0
        %2585 = vmatmul.mubr.bf16.gmra.mrb[0].mxu0 %v2537
        %v2586 = vpop.f32.mrb[0].mxu0
        %v2587 = vadd.f32 0.0, %v2586
        %v2588 = vpop.f32.mrb[0].mxu0
        %v2589 = vpop.f32.mrb[0].mxu0
        %v2590 = vadd.f32 0.0, %v2589
        %v2591 = vpop.f32.mrb[0].mxu0
        %2592 = vmatprep.mubr.bf16.mxu0 0
        %2593 = vmatmul.mubr.bf16.gmra.mrb[0].mxu0 %v2540
        %v2594 = vpop.f32.mrb[0].mxu0
        %v2595 = vadd.f32 0.0, %v2594
        %v2596 = vpop.f32.mrb[0].mxu0
        %v2597 = vpop.f32.mrb[0].mxu0
        %v2598 = vadd.f32 0.0, %v2597
        %v2599 = vpop.f32.mrb[0].mxu0
        %2600 = vmatprep.mubr.bf16.mxu0 0
        %2601 = vmatmul.mubr.bf16.gmra.mrb[0].mxu0 %v2543
        %v2602 = vpop.f32.mrb[0].mxu0
        %v2603 = vadd.f32 0.0, %v2602
        %v2604 = vpop.f32.mrb[0].mxu0
        %v2605 = vpop.f32.mrb[0].mxu0
        %v2606 = vadd.f32 0.0, %v2605
        %v2607 = vpop.f32.mrb[0].mxu0
        %2608 = vmatprep.mubr.bf16.mxu0 0
        %2609 = vmatmul.mubr.bf16.gmra.mrb[0].mxu0 %v2546
        %v2610 = vpop.f32.mrb[0].mxu0
        %v2611 = vadd.f32 0.0, %v2610
        %v2612 = vpop.f32.mrb[0].mxu0
        %v2613 = vpop.f32.mrb[0].mxu0
        %v2614 = vadd.f32 0.0, %v2613
        %v2615 = vpop.f32.mrb[0].mxu0
        %2616 = vdwg.mxu0
        %v2617 = vadd.f32 %v2421, %v2587
        %v2618 = vadd.f32 %v2423, %v2590
        %v2619 = vadd.f32 %v2425, %v2595
        %v2620 = vadd.f32 %v2427, %v2598
        %v2621 = vadd.f32 %v2429, %v2603
        %v2622 = vadd.f32 %v2431, %v2606
        %v2623 = vadd.f32 %v2433, %v2611
        %v2624 = vadd.f32 %v2435, %v2614
        %v2625 = vlaneseq
        %v2626 = vshrl.u32 %v2625, 7
        %v2627 = vsub.s32 0, %v2626
        %v2628 = vrot.slane %v2438, %v2627
        %v2629 = vmul.f32 %v2617, %v2628
        %v2630 = vmul.f32 %v2618, %v2628
        %v2631 = vmul.f32 %v2619, %v2628
        %v2632 = vmul.f32 %v2620, %v2628
        %v2633 = vmul.f32 %v2621, %v2628
        %v2634 = vmul.f32 %v2622, %v2628
        %v2635 = vmul.f32 %v2623, %v2628
        %v2636 = vmul.f32 %v2624, %v2628
        %v2637 = vlaneseq
        %v2638 = vshrl.u32 %v2637, 7
        %v2639 = vsub.s32 1, %v2638
        %v2640 = vrot.slane %v2438, %v2639
        %v2641 = vadd.f32 %v2629, %v2640
        %v2642 = vadd.f32 %v2630, %v2640
        %v2643 = vadd.f32 %v2631, %v2640
        %v2644 = vadd.f32 %v2632, %v2640
        %v2645 = vadd.f32 %v2633, %v2640
        %v2646 = vadd.f32 %v2634, %v2640
        %v2647 = vadd.f32 %v2635, %v2640
        %v2648 = vadd.f32 %v2636, %v2640
        %v2649 = vmax.f32 %v2641, 0.0
        %v2650 = vmax.f32 %v2642, 0.0
        %v2651 = vmax.f32 %v2643, 0.0
        %v2652 = vmax.f32 %v2644, 0.0
        %v2653 = vmax.f32 %v2645, 0.0
        %v2654 = vmax.f32 %v2646, 0.0
        %v2655 = vmax.f32 %v2647, 0.0
        %v2656 = vmax.f32 %v2648, 0.0
        %2657 = vst [vmem:[%s443] sm:$0xff] %v2649
        %2658 = vst [vmem:[%s443 + $0x8] sm:$0xff] %v2650
        %2659 = vst [vmem:[%s443 + $0x10] sm:$0xff] %v2651
        %2660 = vst [vmem:[%s443 + $0x18] sm:$0xff] %v2652
        %2661 = vst [vmem:[%s443 + $0x20] sm:$0xff] %v2653
        %2662 = vst [vmem:[%s443 + $0x28] sm:$0xff] %v2654
        %2663 = vst [vmem:[%s443 + $0x30] sm:$0xff] %v2655
        %2664 = vst [vmem:[%s443 + $0x38] sm:$0xff] %v2656
        %s2665 = sand.u32 %s161, 1
        %s2666 = sand.u32 %s161, 1
        %s2667 = smul.addr %s2666, 256
        %s2668 = scalar_lea.vmem [#allocation3], %s2667
        %s2669 = sand.u32 %s187, 1
        %s2670 = scalar_lea.sflag [#allocation5], %s2669
        %s2671 = sand.u32 %s187, 1
        %s2672 = smul.addr %s2671, 64
        %s2673 = scalar_lea.vmem [#allocation4], %s2672
        // Predicated region
        $region83: #{conv_caps_forward.1} parent=77 // pred_check
          %p2674 = pneg %p171
        $region84: #{conv_caps_forward.1} parent=77 // pred_check_branch
          %2676 = sbr.rel (%p2674) target = $region86
        $region85: #{conv_caps_forward.1} parent=77 // pred_region
          %s2677 = smul.u32 8, %s22
          %s2678 = smul.addr %s2677, 2
          %s2679 = smul.addr %s2678, 4
          %s2680 = scalar_lea.vmem %s6, %s2679
          // Predicated region
          $region87: #{conv_caps_forward.1} parent=85 // pred_check
            _
          $region88: #{conv_caps_forward.1} parent=85 // pred_check_branch
            %2682 = sbr.rel (0) target = $region90
          $region89: #{conv_caps_forward.1} parent=85 // pred_region
            // Predicated region
            $region91: #{conv_caps_forward.1} parent=89 // pred_check
              _
            $region92: #{conv_caps_forward.1} parent=89 // pred_check_branch
              %2684 = sbr.rel (0) target = $region94
            $region93: #{conv_caps_forward.1} parent=89 // pred_region
              // Predicated region
              $region106: #{conv_caps_forward.1} parent=93 // pred_check
                _
              $region107: #{conv_caps_forward.1} parent=93 // pred_check_branch
                %2761 = sbr.rel (0) target = $region109
              $region108: #{conv_caps_forward.1} parent=93 // pred_region
                loop: start=0, step=1, limit=1
                $region110: #{conv_caps_forward.1} parent=108 // loop_pre_header
                  _
                $region111: #{conv_caps_forward.1} parent=108 // loop_header
                  %s2763 = sphi 0, %s2767
                  %p2764 = scmp.ge.s32.totalorder %s2763, 1
                  %s2768 = sphi %s2668, %s2668
                  %s2769 = sphi %s2680, %s2680
                $region112: #{conv_caps_forward.1} parent=108 // loop_header_branch
                  %2766 = sbr.rel (%p2764) target = $region116
                $region113: #{conv_caps_forward.1} parent=108 // loop_body
                  %v2770 = vld [vmem:[%s2768] sm:$0xff]
                  %2771 = vst [vmem:[%s2769] sm:$0xff] %v2770
                  %v2772 = vld [vmem:[%s2768 + $0x8] sm:$0xff]
                  %2773 = vst [vmem:[%s2769 + $0x8] sm:$0xff] %v2772
                  %v2774 = vld [vmem:[%s2768 + $0x10] sm:$0xff]
                  %2775 = vst [vmem:[%s2769 + $0x10] sm:$0xff] %v2774
                  %v2776 = vld [vmem:[%s2768 + $0x18] sm:$0xff]
                  %2777 = vst [vmem:[%s2769 + $0x18] sm:$0xff] %v2776
                  %v2778 = vld [vmem:[%s2768 + $0x20] sm:$0xff]
                  %2779 = vst [vmem:[%s2769 + $0x20] sm:$0xff] %v2778
                  %v2780 = vld [vmem:[%s2768 + $0x28] sm:$0xff]
                  %2781 = vst [vmem:[%s2769 + $0x28] sm:$0xff] %v2780
                  %v2782 = vld [vmem:[%s2768 + $0x30] sm:$0xff]
                  %2783 = vst [vmem:[%s2769 + $0x30] sm:$0xff] %v2782
                  %v2784 = vld [vmem:[%s2768 + $0x38] sm:$0xff]
                  %2785 = vst [vmem:[%s2769 + $0x38] sm:$0xff] %v2784
                  %v2786 = vld [vmem:[%s2768 + $0x40] sm:$0xff]
                  %2787 = vst [vmem:[%s2769 + $0x80] sm:$0xff] %v2786
                  %v2788 = vld [vmem:[%s2768 + $0x48] sm:$0xff]
                  %2789 = vst [vmem:[%s2769 + $0x88] sm:$0xff] %v2788
                  %v2790 = vld [vmem:[%s2768 + $0x50] sm:$0xff]
                  %2791 = vst [vmem:[%s2769 + $0x90] sm:$0xff] %v2790
                  %v2792 = vld [vmem:[%s2768 + $0x58] sm:$0xff]
                  %2793 = vst [vmem:[%s2769 + $0x98] sm:$0xff] %v2792
                  %v2794 = vld [vmem:[%s2768 + $0x60] sm:$0xff]
                  %2795 = vst [vmem:[%s2769 + $0xa0] sm:$0xff] %v2794
                  %v2796 = vld [vmem:[%s2768 + $0x68] sm:$0xff]
                  %2797 = vst [vmem:[%s2769 + $0xa8] sm:$0xff] %v2796
                  %v2798 = vld [vmem:[%s2768 + $0x70] sm:$0xff]
                  %2799 = vst [vmem:[%s2769 + $0xb0] sm:$0xff] %v2798
                  %v2800 = vld [vmem:[%s2768 + $0x78] sm:$0xff]
                  %2801 = vst [vmem:[%s2769 + $0xb8] sm:$0xff] %v2800
                  %v2802 = vld [vmem:[%s2768 + $0x80] sm:$0xff]
                  %2803 = vst [vmem:[%s2769 + $0x100] sm:$0xff] %v2802
                  %v2804 = vld [vmem:[%s2768 + $0x88] sm:$0xff]
                  %2805 = vst [vmem:[%s2769 + $0x108] sm:$0xff] %v2804
                  %v2806 = vld [vmem:[%s2768 + $0x90] sm:$0xff]
                  %2807 = vst [vmem:[%s2769 + $0x110] sm:$0xff] %v2806
                  %v2808 = vld [vmem:[%s2768 + $0x98] sm:$0xff]
                  %2809 = vst [vmem:[%s2769 + $0x118] sm:$0xff] %v2808
                  %v2810 = vld [vmem:[%s2768 + $0xa0] sm:$0xff]
                  %2811 = vst [vmem:[%s2769 + $0x120] sm:$0xff] %v2810
                  %v2812 = vld [vmem:[%s2768 + $0xa8] sm:$0xff]
                  %2813 = vst [vmem:[%s2769 + $0x128] sm:$0xff] %v2812
                  %v2814 = vld [vmem:[%s2768 + $0xb0] sm:$0xff]
                  %2815 = vst [vmem:[%s2769 + $0x130] sm:$0xff] %v2814
                  %v2816 = vld [vmem:[%s2768 + $0xb8] sm:$0xff]
                  %2817 = vst [vmem:[%s2769 + $0x138] sm:$0xff] %v2816
                  %v2818 = vld [vmem:[%s2768 + $0xc0] sm:$0xff]
                  %2819 = vst [vmem:[%s2769 + $0x180] sm:$0xff] %v2818
                  %v2820 = vld [vmem:[%s2768 + $0xc8] sm:$0xff]
                  %2821 = vst [vmem:[%s2769 + $0x188] sm:$0xff] %v2820
                  %v2822 = vld [vmem:[%s2768 + $0xd0] sm:$0xff]
                  %2823 = vst [vmem:[%s2769 + $0x190] sm:$0xff] %v2822
                  %v2824 = vld [vmem:[%s2768 + $0xd8] sm:$0xff]
                  %2825 = vst [vmem:[%s2769 + $0x198] sm:$0xff] %v2824
                  %v2826 = vld [vmem:[%s2768 + $0xe0] sm:$0xff]
                  %2827 = vst [vmem:[%s2769 + $0x1a0] sm:$0xff] %v2826
                  %v2828 = vld [vmem:[%s2768 + $0xe8] sm:$0xff]
                  %2829 = vst [vmem:[%s2769 + $0x1a8] sm:$0xff] %v2828
                  %v2830 = vld [vmem:[%s2768 + $0xf0] sm:$0xff]
                  %2831 = vst [vmem:[%s2769 + $0x1b0] sm:$0xff] %v2830
                  %v2832 = vld [vmem:[%s2768 + $0xf8] sm:$0xff]
                  %2833 = vst [vmem:[%s2769 + $0x1b8] sm:$0xff] %v2832
                $region114: #{conv_caps_forward.1} parent=108 // loop_footer
                  %s2767 = sadd.s32 1, %s2763
                $region115: #{conv_caps_forward.1} parent=108 // loop_footer_branch
                  %2762 = sbr.rel target = $region111
                $region116: #{conv_caps_forward.1} parent=108 // loop_exit
                  _
              $region109: #{conv_caps_forward.1} parent=93 // pred_fallthru
                _
              // Predicated region
              $region117: #{conv_caps_forward.1} parent=93 // pred_check
                _
              $region118: #{conv_caps_forward.1} parent=93 // pred_check_branch
                %2835 = sbr.rel target = $region120
              $region119: #{conv_caps_forward.1} parent=93 // pred_region
                _
              $region120: #{conv_caps_forward.1} parent=93 // pred_fallthru
                _
            $region94: #{conv_caps_forward.1} parent=89 // pred_fallthru
              _
            // Predicated region
            $region95: #{conv_caps_forward.1} parent=89 // pred_check
              _
            $region96: #{conv_caps_forward.1} parent=89 // pred_check_branch
              %2686 = sbr.rel target = $region98
            $region97: #{conv_caps_forward.1} parent=89 // pred_region
              loop: start=0, step=1, limit=1
              $region99: #{conv_caps_forward.1} parent=97 // loop_pre_header
                _
              $region100: #{conv_caps_forward.1} parent=97 // loop_header
                %s2689 = sphi 0, %s2693
                %p2690 = scmp.ge.s32.totalorder %s2689, 1
                %s2694 = sphi %s2668, %s2668
                %s2695 = sphi %s2680, %s2680
              $region101: #{conv_caps_forward.1} parent=97 // loop_header_branch
                %2692 = sbr.rel (%p2690) target = $region105
              $region102: #{conv_caps_forward.1} parent=97 // loop_body
                %v2696 = vld [vmem:[%s2694] sm:$0xff]
                %2697 = vst [vmem:[%s2695] sm:$0xff] %v2696
                %v2698 = vld [vmem:[%s2694 + $0x8] sm:$0xff]
                %2699 = vst [vmem:[%s2695 + $0x8] sm:$0xff] %v2698
                %v2700 = vld [vmem:[%s2694 + $0x10] sm:$0xff]
                %2701 = vst [vmem:[%s2695 + $0x10] sm:$0xff] %v2700
                %v2702 = vld [vmem:[%s2694 + $0x18] sm:$0xff]
                %2703 = vst [vmem:[%s2695 + $0x18] sm:$0xff] %v2702
                %v2704 = vld [vmem:[%s2694 + $0x20] sm:$0xff]
                %2705 = vst [vmem:[%s2695 + $0x20] sm:$0xff] %v2704
                %v2706 = vld [vmem:[%s2694 + $0x28] sm:$0xff]
                %2707 = vst [vmem:[%s2695 + $0x28] sm:$0xff] %v2706
                %v2708 = vld [vmem:[%s2694 + $0x30] sm:$0xff]
                %2709 = vst [vmem:[%s2695 + $0x30] sm:$0xff] %v2708
                %v2710 = vld [vmem:[%s2694 + $0x38] sm:$0xff]
                %2711 = vst [vmem:[%s2695 + $0x38] sm:$0xff] %v2710
                %v2712 = vld [vmem:[%s2694 + $0x40] sm:$0xff]
                %2713 = vst [vmem:[%s2695 + $0x80] sm:$0xff] %v2712
                %v2714 = vld [vmem:[%s2694 + $0x48] sm:$0xff]
                %2715 = vst [vmem:[%s2695 + $0x88] sm:$0xff] %v2714
                %v2716 = vld [vmem:[%s2694 + $0x50] sm:$0xff]
                %2717 = vst [vmem:[%s2695 + $0x90] sm:$0xff] %v2716
                %v2718 = vld [vmem:[%s2694 + $0x58] sm:$0xff]
                %2719 = vst [vmem:[%s2695 + $0x98] sm:$0xff] %v2718
                %v2720 = vld [vmem:[%s2694 + $0x60] sm:$0xff]
                %2721 = vst [vmem:[%s2695 + $0xa0] sm:$0xff] %v2720
                %v2722 = vld [vmem:[%s2694 + $0x68] sm:$0xff]
                %2723 = vst [vmem:[%s2695 + $0xa8] sm:$0xff] %v2722
                %v2724 = vld [vmem:[%s2694 + $0x70] sm:$0xff]
                %2725 = vst [vmem:[%s2695 + $0xb0] sm:$0xff] %v2724
                %v2726 = vld [vmem:[%s2694 + $0x78] sm:$0xff]
                %2727 = vst [vmem:[%s2695 + $0xb8] sm:$0xff] %v2726
                %v2728 = vld [vmem:[%s2694 + $0x80] sm:$0xff]
                %2729 = vst [vmem:[%s2695 + $0x100] sm:$0xff] %v2728
                %v2730 = vld [vmem:[%s2694 + $0x88] sm:$0xff]
                %2731 = vst [vmem:[%s2695 + $0x108] sm:$0xff] %v2730
                %v2732 = vld [vmem:[%s2694 + $0x90] sm:$0xff]
                %2733 = vst [vmem:[%s2695 + $0x110] sm:$0xff] %v2732
                %v2734 = vld [vmem:[%s2694 + $0x98] sm:$0xff]
                %2735 = vst [vmem:[%s2695 + $0x118] sm:$0xff] %v2734
                %v2736 = vld [vmem:[%s2694 + $0xa0] sm:$0xff]
                %2737 = vst [vmem:[%s2695 + $0x120] sm:$0xff] %v2736
                %v2738 = vld [vmem:[%s2694 + $0xa8] sm:$0xff]
                %2739 = vst [vmem:[%s2695 + $0x128] sm:$0xff] %v2738
                %v2740 = vld [vmem:[%s2694 + $0xb0] sm:$0xff]
                %2741 = vst [vmem:[%s2695 + $0x130] sm:$0xff] %v2740
                %v2742 = vld [vmem:[%s2694 + $0xb8] sm:$0xff]
                %2743 = vst [vmem:[%s2695 + $0x138] sm:$0xff] %v2742
                %v2744 = vld [vmem:[%s2694 + $0xc0] sm:$0xff]
                %2745 = vst [vmem:[%s2695 + $0x180] sm:$0xff] %v2744
                %v2746 = vld [vmem:[%s2694 + $0xc8] sm:$0xff]
                %2747 = vst [vmem:[%s2695 + $0x188] sm:$0xff] %v2746
                %v2748 = vld [vmem:[%s2694 + $0xd0] sm:$0xff]
                %2749 = vst [vmem:[%s2695 + $0x190] sm:$0xff] %v2748
                %v2750 = vld [vmem:[%s2694 + $0xd8] sm:$0xff]
                %2751 = vst [vmem:[%s2695 + $0x198] sm:$0xff] %v2750
                %v2752 = vld [vmem:[%s2694 + $0xe0] sm:$0xff]
                %2753 = vst [vmem:[%s2695 + $0x1a0] sm:$0xff] %v2752
                %v2754 = vld [vmem:[%s2694 + $0xe8] sm:$0xff]
                %2755 = vst [vmem:[%s2695 + $0x1a8] sm:$0xff] %v2754
                %v2756 = vld [vmem:[%s2694 + $0xf0] sm:$0xff]
                %2757 = vst [vmem:[%s2695 + $0x1b0] sm:$0xff] %v2756
                %v2758 = vld [vmem:[%s2694 + $0xf8] sm:$0xff]
                %2759 = vst [vmem:[%s2695 + $0x1b8] sm:$0xff] %v2758
              $region103: #{conv_caps_forward.1} parent=97 // loop_footer
                %s2693 = sadd.s32 1, %s2689
              $region104: #{conv_caps_forward.1} parent=97 // loop_footer_branch
                %2688 = sbr.rel target = $region100
              $region105: #{conv_caps_forward.1} parent=97 // loop_exit
                _
            $region98: #{conv_caps_forward.1} parent=89 // pred_fallthru
              _
          $region90: #{conv_caps_forward.1} parent=85 // pred_fallthru
            _
          %2836 = vnop
        $region86: #{conv_caps_forward.1} parent=77 // pred_fallthru
          _
        // Predicated region
        $region121: #{conv_caps_forward.1} parent=77 // pred_check
          %p2837 = pneg %p197
        $region122: #{conv_caps_forward.1} parent=77 // pred_check_branch
          %2839 = sbr.rel (%p2837) target = $region124
        $region123: #{conv_caps_forward.1} parent=77 // pred_region
          %s2840 = smul.u32 8, %s22
          %s2842 = ssub.s32 1024, 1024
          %2843 = vsyncadd %s2670, %s2842
          %s2844 = smul.addr %s2840, 128
          %s2845 = scalar_lea.hbm %s7, %s2844
          %s2846 = sshll.u32 %s2673, 4
          %s2847 = int_to_ptr.vmem [resolvable:$true] %s2846
          %2852 = dma.vmem_to_hbm [thread:$0]  %s2847, 1024, %s2845, %s2670, 128, 128, 8
        $region124: #{conv_caps_forward.1} parent=77 // pred_fallthru
          _
      $region78: #{conv_caps_forward.1} parent=5 // pred_fallthru
        _
      %p2853 = scmp.le.s32.totalorder 2, %s17
      // Predicated region
      $region125: #{conv_caps_forward.1} parent=5 // pred_check
        %p2854 = pneg %p2853
      $region126: #{conv_caps_forward.1} parent=5 // pred_check_branch
        %2856 = sbr.rel (%p2854) target = $region128
      $region127: #{conv_caps_forward.1} parent=5 // pred_region
        %s2857 = ssub.s32 %s17, 2
        // Predicated region
        $region129: #{conv_caps_forward.1} parent=127 // pred_check
          %p2858 = pneg %p177
        $region130: #{conv_caps_forward.1} parent=127 // pred_check_branch
          %2860 = sbr.rel (%p2858) target = $region132
        $region131: #{conv_caps_forward.1} parent=127 // pred_region
          %s2861 = sand.u32 %s162, 1
          %s2862 = sand.u32 %s162, 1
          %s2863 = smul.addr %s2862, 256
          %s2864 = scalar_lea.vmem [#allocation3], %s2863
        $region132: #{conv_caps_forward.1} parent=127 // pred_fallthru
          _
        // Predicated region
        $region133: #{conv_caps_forward.1} parent=127 // pred_check
          %p2865 = pneg %p203
        $region134: #{conv_caps_forward.1} parent=127 // pred_check_branch
          %2867 = sbr.rel (%p2865) target = $region136
        $region135: #{conv_caps_forward.1} parent=127 // pred_region
          %s2868 = sand.u32 %s188, 1
          %s2869 = scalar_lea.sflag [#allocation5], %s2868
          %s2870 = sand.u32 %s188, 1
          %s2871 = smul.addr %s2870, 64
          %s2872 = scalar_lea.vmem [#allocation4], %s2871
          %2873 = dma.done %s2869, 1024
        $region136: #{conv_caps_forward.1} parent=127 // pred_fallthru
          _
      $region128: #{conv_caps_forward.1} parent=5 // pred_fallthru
        _
    $region6: #{conv_caps_forward.1} parent=1 // loop_footer
      %s21 = sadd.s32 1, %s17
    $region7: #{conv_caps_forward.1} parent=1 // loop_footer_branch
      %16 = sbr.rel target = $region3
    $region8: #{conv_caps_forward.1} parent=1 // loop_exit
      _
    %2874 = vsyncpa [#allocation5], 1
    %s2875 = scalar_lea.sflag [#allocation5], 1
    %2876 = vsyncpa %s2875, 1

</llo_original>
